<compile_context>
chip_gen: v7x
topology: tpu7x:2x2x1
jax: 0.10.0
libtpu: 0.0.40
codegen_flags: <defaults>
</compile_context>

<pallas_src>
import functools

import jax
import jax.numpy as jnp
from jax.experimental import pallas as pl
from jax.experimental.pallas import tpu as pltpu


def get_temperature(epoch):
    # host-side python, identical to the PyTorch helper
    return 30.0 - 2.9 * epoch if epoch < 10 else 1.0


# -----------------------------------------------------------------------------
# Pallas kernel: grid = (batch, T output frames), both axes "parallel".
#
# Per step the kernel sees the three padded input frames t, t+1, t+2 (one per
# temporal tap kt), each flattened to (Cin, Hp*Wp), the per-sample pre-mixed
# weights laid out as (27, Cout, Cin) (tap index = kt*9 + kh*3 + kw) and the
# pre-mixed bias.  For tap (kh, kw) the shifted input view is just the
# lane-offset slice [:, d : d + nq] with d = kh*Wp + kw of the flattened
# frame, so "im2col" is 9 in-VMEM slices per frame and never touches HBM
# (the slice relayouts cost VMEM/XLU slots, not HBM bandwidth — the kernel
# is HBM-bound, so that is the right trade).
# -----------------------------------------------------------------------------
def dyn_conv_kernel(x0_ref, x1_ref, x2_ref, w_ref, b_ref, o_ref, *, wp):
    nq = o_ref.shape[-1]
    frames = (x0_ref[...], x1_ref[...], x2_ref[...])   # (Cin, Hp*Wp) bf16 each

    acc = None
    for kt in range(3):
        xf = frames[kt]
        for kh in range(3):
            for kw in range(3):
                d = kh * wp + kw                       # flat shift in padded coords
                part = jnp.dot(w_ref[kt * 9 + kh * 3 + kw],   # (Cout, Cin) bf16
                               xf[:, d:d + nq],                # (Cin, nq)   bf16
                               preferred_element_type=jnp.float32)
                acc = part if acc is None else acc + part
    o_ref[...] = (acc + b_ref[...]).astype(o_ref.dtype)


# -----------------------------------------------------------------------------
# Plain-JAX glue
# -----------------------------------------------------------------------------
def dynamic_conv_pallas(x, params, epochs_num):
    n, cin, T, H, W = x.shape
    nw, cout = params['biases'].shape
    tau = float(get_temperature(epochs_num))

    tp, hp, wp = T + 2, H + 2, W + 2
    hpwp = hp * wp
    # Flat padded-width span that covers every valid output pixel q = h*Wp + w.
    nq = (H - 1) * wp + W

    # ---- gating path (tiny, f32, plain JAX, computed once per batch) --------
    gm = jnp.max(x, axis=(2, 3, 4))                                   # (n, Cin)
    hid = jax.nn.relu(gm @ params['w1'] + params['b1'])
    logits = hid @ params['w2'] + params['b2']
    phi = jax.nn.softmax(logits / tau, axis=1).astype(jnp.float32)    # (n, nw)

    # ---- per-sample mixed 3x3x3 kernel / bias (wrapper, negligible FLOPs) ---
    # weights: (nw, Cout, Cin, kt, kh, kw) -> (n, 27, Cout, Cin), tap-major.
    wdyn = jnp.einsum('bn,noituv->boituv', phi, params['weights'])    # f32
    wtaps = jnp.transpose(wdyn, (0, 3, 4, 5, 1, 2)).reshape(n, 27, cout, cin)
    wtaps = wtaps.astype(jnp.bfloat16)                                # MXU operand
    bdyn = (phi @ params['biases']).astype(jnp.float32).reshape(n, cout, 1)

    # ---- raw padded input, bf16 (cast BEFORE padding), frames flattened -----
    xp = jnp.transpose(x, (0, 2, 1, 3, 4)).astype(jnp.bfloat16)       # (n,T,Cin,H,W)
    xp = jnp.pad(xp, ((0, 0), (1, 1), (0, 0), (1, 1), (1, 1)))        # (n,Tp,Cin,Hp,Wp)
    xp = xp.reshape(n, tp, cin, hpwp)                                 # (n,Tp,Cin,Hp*Wp)

    # ---- explicit VMEM accounting (double-buffered blocks) ------------------
    vmem_needed = (2 * 3 * cin * hpwp * 2                      # bf16 frame views
                   + 2 * (27 * cout * cin * 2 + cout * 4)      # weights + bias
                   + 2 * cout * nq * 4)                        # f32 output frame
    vmem_limit = int(min(48 * 2 ** 20, max(4 * 2 ** 20, 8 * vmem_needed)))

    def frame_spec(kt):
        # Padded frame t + kt of sample b, flattened to (Cin, Hp*Wp).
        return pl.BlockSpec((None, None, cin, hpwp),
                            lambda b, t: (b, t + kt, 0, 0))

    kernel = functools.partial(dyn_conv_kernel, wp=wp)

    # NOTE: output stays f32 for accuracy; switch out_shape to bf16 if the
    # consumer tolerates it (halves store traffic).
    out = pl.pallas_call(
        kernel,
        out_shape=jax.ShapeDtypeStruct((n, T, cout, nq), jnp.float32),
        grid=(n, T),
        in_specs=[
            # The SAME padded array is passed three times (one view per kt);
            # each frame is read 3x from HBM instead of 27x with im2col cols.
            frame_spec(0), frame_spec(1), frame_spec(2),
            pl.BlockSpec((None, 27, cout, cin), lambda b, t: (b, 0, 0, 0)),
            pl.BlockSpec((None, cout, 1), lambda b, t: (b, 0, 0)),
        ],
        out_specs=pl.BlockSpec((None, None, cout, nq), lambda b, t: (b, t, 0, 0)),
        compiler_params=pltpu.CompilerParams(
            dimension_semantics=("parallel", "parallel"),
            vmem_limit_bytes=vmem_limit),
    )(xp, xp, xp, wtaps, bdyn)

    # Un-flatten the padded-width layout: q = h*Wp + w -> (h, w), drop the halo.
    out = jnp.pad(out, ((0, 0), (0, 0), (0, 0), (0, wp - W)))         # -> H*Wp
    out = out.reshape(n, T, cout, H, wp)[..., :W]                     # (n,T,Cout,H,W)
    return jnp.transpose(out, (0, 2, 1, 3, 4))                        # (n,Cout,T,H,W)


# -----------------------------------------------------------------------------
# Pure-JAX reference (mirrors the PyTorch forward) for validation
# -----------------------------------------------------------------------------
def dynamic_conv_reference(x, params, epochs_num):
    n, cin, T, H, W = x.shape
    nw, cout = params['biases'].shape
    tau = float(get_temperature(epochs_num))

    gm = jnp.max(x, axis=(2, 3, 4))                                   # (n, Cin)
    h = jax.nn.relu(gm @ params['w1'] + params['b1'])
    logits = h @ params['w2'] + params['b2']
    phi = jax.nn.softmax(logits / tau, axis=1)                        # (n, nw)

    dyn_w = jnp.einsum('bn,nijklm->bijklm', phi, params['weights'])   # (n,Cout,Cin,3,3,3)
    dyn_b = jnp.einsum('bn,ni->bi', phi, params['biases'])            # (n, Cout)

    xg = x.reshape(1, n * cin, T, H, W)
    wg = dyn_w.reshape(n * cout, cin, 3, 3, 3)
    y = jax.lax.conv_general_dilated(
        xg, wg, window_strides=(1, 1, 1),
        padding=((1, 1), (1, 1), (1, 1)),
        feature_group_count=n,
        dimension_numbers=('NCDHW', 'OIDHW', 'NCDHW'))
    y = y.reshape(n, cout, T, H, W) + dyn_b[:, :, None, None, None]
    return y


# -----------------------------------------------------------------------------
def init_params(key, input_dim, dims, num_weights):
    hidden = input_dim // 4 + 1
    k = jax.random.split(key, 6)
    fan_in = input_dim * 3 * 3 * 3
    kaiming_std = (2.0 / fan_in) ** 0.5
    return {
        'weights': jax.random.normal(k[0], (num_weights, dims, input_dim, 3, 3, 3),
                                     jnp.float32) * kaiming_std,
        'biases': jax.random.normal(k[1], (num_weights, dims), jnp.float32),
        'w1': jax.random.normal(k[2], (input_dim, input_dim // 4 + 1), jnp.float32) * 0.5,
        'b1': jax.random.normal(k[3], (hidden,), jnp.float32) * 0.1,
        'w2': jax.random.normal(k[4], (hidden, num_weights), jnp.float32) * 0.5,
        'b2': jax.random.normal(k[5], (num_weights,), jnp.float32) * 0.1,
    }


if __name__ == "__main__":
    key = jax.random.PRNGKey(0)
    kx, kp = jax.random.split(key)

    n, input_dim, dims, num_weights = 2, 4, 4, 3
    T = H = W = 8
    epochs_num = 3

    x = jax.random.normal(kx, (n, input_dim, T, H, W), jnp.float32)
    params = init_params(kp, input_dim, dims, num_weights)

    out = jax.block_until_ready(dynamic_conv_pallas(x, params, epochs_num))
    ref = jax.block_until_ready(dynamic_conv_reference(x, params, epochs_num))

    assert out.shape == (n, dims, T, H, W)
    # Streamed conv operands are bf16 (f32 accumulation), so validate against
    # the pure-f32 reference at a bf16-appropriate tolerance.
    max_diff = float(jnp.max(jnp.abs(out - ref)))
    assert jnp.allclose(out, ref, rtol=2e-2, atol=2e-2), \
        f"max abs diff = {max_diff}"

    print("KERNEL_OK")
</pallas_src>

<mosaic_0001>
module attributes {stable_mosaic.version = 11 : i64} {
  func.func @dyn_conv_kernel(%arg0: i32, %arg1: i32, %arg2: memref<1x1x4x100xbf16, #tpu.memory_space<vmem>>, %arg3: memref<1x1x4x100xbf16, #tpu.memory_space<vmem>>, %arg4: memref<1x1x4x100xbf16, #tpu.memory_space<vmem>>, %arg5: memref<1x27x4x4xbf16, #tpu.memory_space<vmem>>, %arg6: memref<1x4x1xf32, #tpu.memory_space<vmem>>, %arg7: memref<1x1x4x78xf32, #tpu.memory_space<vmem>>) attributes {dimension_semantics = [#tpu.dimension_semantics<parallel>, #tpu.dimension_semantics<parallel>], iteration_bounds = array<i64: 2, 8>, scalar_prefetch = 0 : i64, scratch_operands = 0 : i64, tpu.core_type = #tpu.core_type<tc>, window_params = [{transform_indices = @transform_0, window_bounds = array<i64: 1, 1, 4, 100>}, {transform_indices = @transform_1, window_bounds = array<i64: 1, 1, 4, 100>}, {transform_indices = @transform_2, window_bounds = array<i64: 1, 1, 4, 100>}, {transform_indices = @transform_3, window_bounds = array<i64: 1, 27, 4, 4>}, {transform_indices = @transform_4, window_bounds = array<i64: 1, 4, 1>}, {transform_indices = @transform_5, window_bounds = array<i64: 1, 1, 4, 78>}]} {
    %c0 = arith.constant 0 : index
    %c0_0 = arith.constant 0 : index
    %c0_1 = arith.constant 0 : index
    %c0_2 = arith.constant 0 : index
    %0 = vector.load %arg2[%c0, %c0_0, %c0_1, %c0_2] : memref<1x1x4x100xbf16, #tpu.memory_space<vmem>>, vector<1x1x4x100xbf16>
    %1 = vector.shape_cast %0 : vector<1x1x4x100xbf16> to vector<4x100xbf16>
    %c0_3 = arith.constant 0 : index
    %c0_4 = arith.constant 0 : index
    %c0_5 = arith.constant 0 : index
    %c0_6 = arith.constant 0 : index
    %2 = vector.load %arg3[%c0_3, %c0_4, %c0_5, %c0_6] : memref<1x1x4x100xbf16, #tpu.memory_space<vmem>>, vector<1x1x4x100xbf16>
    %3 = vector.shape_cast %2 : vector<1x1x4x100xbf16> to vector<4x100xbf16>
    %c0_7 = arith.constant 0 : index
    %c0_8 = arith.constant 0 : index
    %c0_9 = arith.constant 0 : index
    %c0_10 = arith.constant 0 : index
    %4 = vector.load %arg4[%c0_7, %c0_8, %c0_9, %c0_10] : memref<1x1x4x100xbf16, #tpu.memory_space<vmem>>, vector<1x1x4x100xbf16>
    %5 = vector.shape_cast %4 : vector<1x1x4x100xbf16> to vector<4x100xbf16>
    %c0_11 = arith.constant 0 : index
    %c0_12 = arith.constant 0 : index
    %c0_13 = arith.constant 0 : index
    %c0_14 = arith.constant 0 : index
    %6 = vector.load %arg5[%c0_11, %c0_12, %c0_13, %c0_14] : memref<1x27x4x4xbf16, #tpu.memory_space<vmem>>, vector<1x1x4x4xbf16>
    %7 = vector.shape_cast %6 : vector<1x1x4x4xbf16> to vector<4x4xbf16>
    %8 = vector.extract_strided_slice %1 {offsets = [0, 0], sizes = [4, 78], strides = [1, 1]} : vector<4x100xbf16> to vector<4x78xbf16>
    %cst = arith.constant dense<0.000000e+00> : vector<4x78xf32>
    %9 = tpu.matmul %7, %8, %cst {dimension_numbers = #tpu.dot_dimension_numbers<[1], [0], [0], [1], [0, 0, 1, 1], [], []>} : vector<4x4xbf16>, vector<4x78xbf16>, vector<4x78xf32> -> vector<4x78xf32>
    %c0_15 = arith.constant 0 : index
    %c1 = arith.constant 1 : index
    %c0_16 = arith.constant 0 : index
    %c0_17 = arith.constant 0 : index
    %10 = vector.load %arg5[%c0_15, %c1, %c0_16, %c0_17] : memref<1x27x4x4xbf16, #tpu.memory_space<vmem>>, vector<1x1x4x4xbf16>
    %11 = vector.shape_cast %10 : vector<1x1x4x4xbf16> to vector<4x4xbf16>
    %12 = vector.extract_strided_slice %1 {offsets = [0, 1], sizes = [4, 78], strides = [1, 1]} : vector<4x100xbf16> to vector<4x78xbf16>
    %cst_18 = arith.constant dense<0.000000e+00> : vector<4x78xf32>
    %13 = tpu.matmul %11, %12, %cst_18 {dimension_numbers = #tpu.dot_dimension_numbers<[1], [0], [0], [1], [0, 0, 1, 1], [], []>} : vector<4x4xbf16>, vector<4x78xbf16>, vector<4x78xf32> -> vector<4x78xf32>
    %14 = arith.addf %9, %13 : vector<4x78xf32>
    %c0_19 = arith.constant 0 : index
    %c2 = arith.constant 2 : index
    %c0_20 = arith.constant 0 : index
    %c0_21 = arith.constant 0 : index
    %15 = vector.load %arg5[%c0_19, %c2, %c0_20, %c0_21] : memref<1x27x4x4xbf16, #tpu.memory_space<vmem>>, vector<1x1x4x4xbf16>
    %16 = vector.shape_cast %15 : vector<1x1x4x4xbf16> to vector<4x4xbf16>
    %17 = vector.extract_strided_slice %1 {offsets = [0, 2], sizes = [4, 78], strides = [1, 1]} : vector<4x100xbf16> to vector<4x78xbf16>
    %cst_22 = arith.constant dense<0.000000e+00> : vector<4x78xf32>
    %18 = tpu.matmul %16, %17, %cst_22 {dimension_numbers = #tpu.dot_dimension_numbers<[1], [0], [0], [1], [0, 0, 1, 1], [], []>} : vector<4x4xbf16>, vector<4x78xbf16>, vector<4x78xf32> -> vector<4x78xf32>
    %19 = arith.addf %14, %18 : vector<4x78xf32>
    %c0_23 = arith.constant 0 : index
    %c3 = arith.constant 3 : index
    %c0_24 = arith.constant 0 : index
    %c0_25 = arith.constant 0 : index
    %20 = vector.load %arg5[%c0_23, %c3, %c0_24, %c0_25] : memref<1x27x4x4xbf16, #tpu.memory_space<vmem>>, vector<1x1x4x4xbf16>
    %21 = vector.shape_cast %20 : vector<1x1x4x4xbf16> to vector<4x4xbf16>
    %22 = vector.extract_strided_slice %1 {offsets = [0, 10], sizes = [4, 78], strides = [1, 1]} : vector<4x100xbf16> to vector<4x78xbf16>
    %cst_26 = arith.constant dense<0.000000e+00> : vector<4x78xf32>
    %23 = tpu.matmul %21, %22, %cst_26 {dimension_numbers = #tpu.dot_dimension_numbers<[1], [0], [0], [1], [0, 0, 1, 1], [], []>} : vector<4x4xbf16>, vector<4x78xbf16>, vector<4x78xf32> -> vector<4x78xf32>
    %24 = arith.addf %19, %23 : vector<4x78xf32>
    %c0_27 = arith.constant 0 : index
    %c4 = arith.constant 4 : index
    %c0_28 = arith.constant 0 : index
    %c0_29 = arith.constant 0 : index
    %25 = vector.load %arg5[%c0_27, %c4, %c0_28, %c0_29] : memref<1x27x4x4xbf16, #tpu.memory_space<vmem>>, vector<1x1x4x4xbf16>
    %26 = vector.shape_cast %25 : vector<1x1x4x4xbf16> to vector<4x4xbf16>
    %27 = vector.extract_strided_slice %1 {offsets = [0, 11], sizes = [4, 78], strides = [1, 1]} : vector<4x100xbf16> to vector<4x78xbf16>
    %cst_30 = arith.constant dense<0.000000e+00> : vector<4x78xf32>
    %28 = tpu.matmul %26, %27, %cst_30 {dimension_numbers = #tpu.dot_dimension_numbers<[1], [0], [0], [1], [0, 0, 1, 1], [], []>} : vector<4x4xbf16>, vector<4x78xbf16>, vector<4x78xf32> -> vector<4x78xf32>
    %29 = arith.addf %24, %28 : vector<4x78xf32>
    %c0_31 = arith.constant 0 : index
    %c5 = arith.constant 5 : index
    %c0_32 = arith.constant 0 : index
    %c0_33 = arith.constant 0 : index
    %30 = vector.load %arg5[%c0_31, %c5, %c0_32, %c0_33] : memref<1x27x4x4xbf16, #tpu.memory_space<vmem>>, vector<1x1x4x4xbf16>
    %31 = vector.shape_cast %30 : vector<1x1x4x4xbf16> to vector<4x4xbf16>
    %32 = vector.extract_strided_slice %1 {offsets = [0, 12], sizes = [4, 78], strides = [1, 1]} : vector<4x100xbf16> to vector<4x78xbf16>
    %cst_34 = arith.constant dense<0.000000e+00> : vector<4x78xf32>
    %33 = tpu.matmul %31, %32, %cst_34 {dimension_numbers = #tpu.dot_dimension_numbers<[1], [0], [0], [1], [0, 0, 1, 1], [], []>} : vector<4x4xbf16>, vector<4x78xbf16>, vector<4x78xf32> -> vector<4x78xf32>
    %34 = arith.addf %29, %33 : vector<4x78xf32>
    %c0_35 = arith.constant 0 : index
    %c6 = arith.constant 6 : index
    %c0_36 = arith.constant 0 : index
    %c0_37 = arith.constant 0 : index
    %35 = vector.load %arg5[%c0_35, %c6, %c0_36, %c0_37] : memref<1x27x4x4xbf16, #tpu.memory_space<vmem>>, vector<1x1x4x4xbf16>
    %36 = vector.shape_cast %35 : vector<1x1x4x4xbf16> to vector<4x4xbf16>
    %37 = vector.extract_strided_slice %1 {offsets = [0, 20], sizes = [4, 78], strides = [1, 1]} : vector<4x100xbf16> to vector<4x78xbf16>
    %cst_38 = arith.constant dense<0.000000e+00> : vector<4x78xf32>
    %38 = tpu.matmul %36, %37, %cst_38 {dimension_numbers = #tpu.dot_dimension_numbers<[1], [0], [0], [1], [0, 0, 1, 1], [], []>} : vector<4x4xbf16>, vector<4x78xbf16>, vector<4x78xf32> -> vector<4x78xf32>
    %39 = arith.addf %34, %38 : vector<4x78xf32>
    %c0_39 = arith.constant 0 : index
    %c7 = arith.constant 7 : index
    %c0_40 = arith.constant 0 : index
    %c0_41 = arith.constant 0 : index
    %40 = vector.load %arg5[%c0_39, %c7, %c0_40, %c0_41] : memref<1x27x4x4xbf16, #tpu.memory_space<vmem>>, vector<1x1x4x4xbf16>
    %41 = vector.shape_cast %40 : vector<1x1x4x4xbf16> to vector<4x4xbf16>
    %42 = vector.extract_strided_slice %1 {offsets = [0, 21], sizes = [4, 78], strides = [1, 1]} : vector<4x100xbf16> to vector<4x78xbf16>
    %cst_42 = arith.constant dense<0.000000e+00> : vector<4x78xf32>
    %43 = tpu.matmul %41, %42, %cst_42 {dimension_numbers = #tpu.dot_dimension_numbers<[1], [0], [0], [1], [0, 0, 1, 1], [], []>} : vector<4x4xbf16>, vector<4x78xbf16>, vector<4x78xf32> -> vector<4x78xf32>
    %44 = arith.addf %39, %43 : vector<4x78xf32>
    %c0_43 = arith.constant 0 : index
    %c8 = arith.constant 8 : index
    %c0_44 = arith.constant 0 : index
    %c0_45 = arith.constant 0 : index
    %45 = vector.load %arg5[%c0_43, %c8, %c0_44, %c0_45] : memref<1x27x4x4xbf16, #tpu.memory_space<vmem>>, vector<1x1x4x4xbf16>
    %46 = vector.shape_cast %45 : vector<1x1x4x4xbf16> to vector<4x4xbf16>
    %47 = vector.extract_strided_slice %1 {offsets = [0, 22], sizes = [4, 78], strides = [1, 1]} : vector<4x100xbf16> to vector<4x78xbf16>
    %cst_46 = arith.constant dense<0.000000e+00> : vector<4x78xf32>
    %48 = tpu.matmul %46, %47, %cst_46 {dimension_numbers = #tpu.dot_dimension_numbers<[1], [0], [0], [1], [0, 0, 1, 1], [], []>} : vector<4x4xbf16>, vector<4x78xbf16>, vector<4x78xf32> -> vector<4x78xf32>
    %49 = arith.addf %44, %48 : vector<4x78xf32>
    %c0_47 = arith.constant 0 : index
    %c9 = arith.constant 9 : index
    %c0_48 = arith.constant 0 : index
    %c0_49 = arith.constant 0 : index
    %50 = vector.load %arg5[%c0_47, %c9, %c0_48, %c0_49] : memref<1x27x4x4xbf16, #tpu.memory_space<vmem>>, vector<1x1x4x4xbf16>
    %51 = vector.shape_cast %50 : vector<1x1x4x4xbf16> to vector<4x4xbf16>
    %52 = vector.extract_strided_slice %3 {offsets = [0, 0], sizes = [4, 78], strides = [1, 1]} : vector<4x100xbf16> to vector<4x78xbf16>
    %cst_50 = arith.constant dense<0.000000e+00> : vector<4x78xf32>
    %53 = tpu.matmul %51, %52, %cst_50 {dimension_numbers = #tpu.dot_dimension_numbers<[1], [0], [0], [1], [0, 0, 1, 1], [], []>} : vector<4x4xbf16>, vector<4x78xbf16>, vector<4x78xf32> -> vector<4x78xf32>
    %54 = arith.addf %49, %53 : vector<4x78xf32>
    %c0_51 = arith.constant 0 : index
    %c10 = arith.constant 10 : index
    %c0_52 = arith.constant 0 : index
    %c0_53 = arith.constant 0 : index
    %55 = vector.load %arg5[%c0_51, %c10, %c0_52, %c0_53] : memref<1x27x4x4xbf16, #tpu.memory_space<vmem>>, vector<1x1x4x4xbf16>
    %56 = vector.shape_cast %55 : vector<1x1x4x4xbf16> to vector<4x4xbf16>
    %57 = vector.extract_strided_slice %3 {offsets = [0, 1], sizes = [4, 78], strides = [1, 1]} : vector<4x100xbf16> to vector<4x78xbf16>
    %cst_54 = arith.constant dense<0.000000e+00> : vector<4x78xf32>
    %58 = tpu.matmul %56, %57, %cst_54 {dimension_numbers = #tpu.dot_dimension_numbers<[1], [0], [0], [1], [0, 0, 1, 1], [], []>} : vector<4x4xbf16>, vector<4x78xbf16>, vector<4x78xf32> -> vector<4x78xf32>
    %59 = arith.addf %54, %58 : vector<4x78xf32>
    %c0_55 = arith.constant 0 : index
    %c11 = arith.constant 11 : index
    %c0_56 = arith.constant 0 : index
    %c0_57 = arith.constant 0 : index
    %60 = vector.load %arg5[%c0_55, %c11, %c0_56, %c0_57] : memref<1x27x4x4xbf16, #tpu.memory_space<vmem>>, vector<1x1x4x4xbf16>
    %61 = vector.shape_cast %60 : vector<1x1x4x4xbf16> to vector<4x4xbf16>
    %62 = vector.extract_strided_slice %3 {offsets = [0, 2], sizes = [4, 78], strides = [1, 1]} : vector<4x100xbf16> to vector<4x78xbf16>
    %cst_58 = arith.constant dense<0.000000e+00> : vector<4x78xf32>
    %63 = tpu.matmul %61, %62, %cst_58 {dimension_numbers = #tpu.dot_dimension_numbers<[1], [0], [0], [1], [0, 0, 1, 1], [], []>} : vector<4x4xbf16>, vector<4x78xbf16>, vector<4x78xf32> -> vector<4x78xf32>
    %64 = arith.addf %59, %63 : vector<4x78xf32>
    %c0_59 = arith.constant 0 : index
    %c12 = arith.constant 12 : index
    %c0_60 = arith.constant 0 : index
    %c0_61 = arith.constant 0 : index
    %65 = vector.load %arg5[%c0_59, %c12, %c0_60, %c0_61] : memref<1x27x4x4xbf16, #tpu.memory_space<vmem>>, vector<1x1x4x4xbf16>
    %66 = vector.shape_cast %65 : vector<1x1x4x4xbf16> to vector<4x4xbf16>
    %67 = vector.extract_strided_slice %3 {offsets = [0, 10], sizes = [4, 78], strides = [1, 1]} : vector<4x100xbf16> to vector<4x78xbf16>
    %cst_62 = arith.constant dense<0.000000e+00> : vector<4x78xf32>
    %68 = tpu.matmul %66, %67, %cst_62 {dimension_numbers = #tpu.dot_dimension_numbers<[1], [0], [0], [1], [0, 0, 1, 1], [], []>} : vector<4x4xbf16>, vector<4x78xbf16>, vector<4x78xf32> -> vector<4x78xf32>
    %69 = arith.addf %64, %68 : vector<4x78xf32>
    %c0_63 = arith.constant 0 : index
    %c13 = arith.constant 13 : index
    %c0_64 = arith.constant 0 : index
    %c0_65 = arith.constant 0 : index
    %70 = vector.load %arg5[%c0_63, %c13, %c0_64, %c0_65] : memref<1x27x4x4xbf16, #tpu.memory_space<vmem>>, vector<1x1x4x4xbf16>
    %71 = vector.shape_cast %70 : vector<1x1x4x4xbf16> to vector<4x4xbf16>
    %72 = vector.extract_strided_slice %3 {offsets = [0, 11], sizes = [4, 78], strides = [1, 1]} : vector<4x100xbf16> to vector<4x78xbf16>
    %cst_66 = arith.constant dense<0.000000e+00> : vector<4x78xf32>
    %73 = tpu.matmul %71, %72, %cst_66 {dimension_numbers = #tpu.dot_dimension_numbers<[1], [0], [0], [1], [0, 0, 1, 1], [], []>} : vector<4x4xbf16>, vector<4x78xbf16>, vector<4x78xf32> -> vector<4x78xf32>
    %74 = arith.addf %69, %73 : vector<4x78xf32>
    %c0_67 = arith.constant 0 : index
    %c14 = arith.constant 14 : index
    %c0_68 = arith.constant 0 : index
    %c0_69 = arith.constant 0 : index
    %75 = vector.load %arg5[%c0_67, %c14, %c0_68, %c0_69] : memref<1x27x4x4xbf16, #tpu.memory_space<vmem>>, vector<1x1x4x4xbf16>
    %76 = vector.shape_cast %75 : vector<1x1x4x4xbf16> to vector<4x4xbf16>
    %77 = vector.extract_strided_slice %3 {offsets = [0, 12], sizes = [4, 78], strides = [1, 1]} : vector<4x100xbf16> to vector<4x78xbf16>
    %cst_70 = arith.constant dense<0.000000e+00> : vector<4x78xf32>
    %78 = tpu.matmul %76, %77, %cst_70 {dimension_numbers = #tpu.dot_dimension_numbers<[1], [0], [0], [1], [0, 0, 1, 1], [], []>} : vector<4x4xbf16>, vector<4x78xbf16>, vector<4x78xf32> -> vector<4x78xf32>
    %79 = arith.addf %74, %78 : vector<4x78xf32>
    %c0_71 = arith.constant 0 : index
    %c15 = arith.constant 15 : index
    %c0_72 = arith.constant 0 : index
    %c0_73 = arith.constant 0 : index
    %80 = vector.load %arg5[%c0_71, %c15, %c0_72, %c0_73] : memref<1x27x4x4xbf16, #tpu.memory_space<vmem>>, vector<1x1x4x4xbf16>
    %81 = vector.shape_cast %80 : vector<1x1x4x4xbf16> to vector<4x4xbf16>
    %82 = vector.extract_strided_slice %3 {offsets = [0, 20], sizes = [4, 78], strides = [1, 1]} : vector<4x100xbf16> to vector<4x78xbf16>
    %cst_74 = arith.constant dense<0.000000e+00> : vector<4x78xf32>
    %83 = tpu.matmul %81, %82, %cst_74 {dimension_numbers = #tpu.dot_dimension_numbers<[1], [0], [0], [1], [0, 0, 1, 1], [], []>} : vector<4x4xbf16>, vector<4x78xbf16>, vector<4x78xf32> -> vector<4x78xf32>
    %84 = arith.addf %79, %83 : vector<4x78xf32>
    %c0_75 = arith.constant 0 : index
    %c16 = arith.constant 16 : index
    %c0_76 = arith.constant 0 : index
    %c0_77 = arith.constant 0 : index
    %85 = vector.load %arg5[%c0_75, %c16, %c0_76, %c0_77] : memref<1x27x4x4xbf16, #tpu.memory_space<vmem>>, vector<1x1x4x4xbf16>
    %86 = vector.shape_cast %85 : vector<1x1x4x4xbf16> to vector<4x4xbf16>
    %87 = vector.extract_strided_slice %3 {offsets = [0, 21], sizes = [4, 78], strides = [1, 1]} : vector<4x100xbf16> to vector<4x78xbf16>
    %cst_78 = arith.constant dense<0.000000e+00> : vector<4x78xf32>
    %88 = tpu.matmul %86, %87, %cst_78 {dimension_numbers = #tpu.dot_dimension_numbers<[1], [0], [0], [1], [0, 0, 1, 1], [], []>} : vector<4x4xbf16>, vector<4x78xbf16>, vector<4x78xf32> -> vector<4x78xf32>
    %89 = arith.addf %84, %88 : vector<4x78xf32>
    %c0_79 = arith.constant 0 : index
    %c17 = arith.constant 17 : index
    %c0_80 = arith.constant 0 : index
    %c0_81 = arith.constant 0 : index
    %90 = vector.load %arg5[%c0_79, %c17, %c0_80, %c0_81] : memref<1x27x4x4xbf16, #tpu.memory_space<vmem>>, vector<1x1x4x4xbf16>
    %91 = vector.shape_cast %90 : vector<1x1x4x4xbf16> to vector<4x4xbf16>
    %92 = vector.extract_strided_slice %3 {offsets = [0, 22], sizes = [4, 78], strides = [1, 1]} : vector<4x100xbf16> to vector<4x78xbf16>
    %cst_82 = arith.constant dense<0.000000e+00> : vector<4x78xf32>
    %93 = tpu.matmul %91, %92, %cst_82 {dimension_numbers = #tpu.dot_dimension_numbers<[1], [0], [0], [1], [0, 0, 1, 1], [], []>} : vector<4x4xbf16>, vector<4x78xbf16>, vector<4x78xf32> -> vector<4x78xf32>
    %94 = arith.addf %89, %93 : vector<4x78xf32>
    %c0_83 = arith.constant 0 : index
    %c18 = arith.constant 18 : index
    %c0_84 = arith.constant 0 : index
    %c0_85 = arith.constant 0 : index
    %95 = vector.load %arg5[%c0_83, %c18, %c0_84, %c0_85] : memref<1x27x4x4xbf16, #tpu.memory_space<vmem>>, vector<1x1x4x4xbf16>
    %96 = vector.shape_cast %95 : vector<1x1x4x4xbf16> to vector<4x4xbf16>
    %97 = vector.extract_strided_slice %5 {offsets = [0, 0], sizes = [4, 78], strides = [1, 1]} : vector<4x100xbf16> to vector<4x78xbf16>
    %cst_86 = arith.constant dense<0.000000e+00> : vector<4x78xf32>
    %98 = tpu.matmul %96, %97, %cst_86 {dimension_numbers = #tpu.dot_dimension_numbers<[1], [0], [0], [1], [0, 0, 1, 1], [], []>} : vector<4x4xbf16>, vector<4x78xbf16>, vector<4x78xf32> -> vector<4x78xf32>
    %99 = arith.addf %94, %98 : vector<4x78xf32>
    %c0_87 = arith.constant 0 : index
    %c19 = arith.constant 19 : index
    %c0_88 = arith.constant 0 : index
    %c0_89 = arith.constant 0 : index
    %100 = vector.load %arg5[%c0_87, %c19, %c0_88, %c0_89] : memref<1x27x4x4xbf16, #tpu.memory_space<vmem>>, vector<1x1x4x4xbf16>
    %101 = vector.shape_cast %100 : vector<1x1x4x4xbf16> to vector<4x4xbf16>
    %102 = vector.extract_strided_slice %5 {offsets = [0, 1], sizes = [4, 78], strides = [1, 1]} : vector<4x100xbf16> to vector<4x78xbf16>
    %cst_90 = arith.constant dense<0.000000e+00> : vector<4x78xf32>
    %103 = tpu.matmul %101, %102, %cst_90 {dimension_numbers = #tpu.dot_dimension_numbers<[1], [0], [0], [1], [0, 0, 1, 1], [], []>} : vector<4x4xbf16>, vector<4x78xbf16>, vector<4x78xf32> -> vector<4x78xf32>
    %104 = arith.addf %99, %103 : vector<4x78xf32>
    %c0_91 = arith.constant 0 : index
    %c20 = arith.constant 20 : index
    %c0_92 = arith.constant 0 : index
    %c0_93 = arith.constant 0 : index
    %105 = vector.load %arg5[%c0_91, %c20, %c0_92, %c0_93] : memref<1x27x4x4xbf16, #tpu.memory_space<vmem>>, vector<1x1x4x4xbf16>
    %106 = vector.shape_cast %105 : vector<1x1x4x4xbf16> to vector<4x4xbf16>
    %107 = vector.extract_strided_slice %5 {offsets = [0, 2], sizes = [4, 78], strides = [1, 1]} : vector<4x100xbf16> to vector<4x78xbf16>
    %cst_94 = arith.constant dense<0.000000e+00> : vector<4x78xf32>
    %108 = tpu.matmul %106, %107, %cst_94 {dimension_numbers = #tpu.dot_dimension_numbers<[1], [0], [0], [1], [0, 0, 1, 1], [], []>} : vector<4x4xbf16>, vector<4x78xbf16>, vector<4x78xf32> -> vector<4x78xf32>
    %109 = arith.addf %104, %108 : vector<4x78xf32>
    %c0_95 = arith.constant 0 : index
    %c21 = arith.constant 21 : index
    %c0_96 = arith.constant 0 : index
    %c0_97 = arith.constant 0 : index
    %110 = vector.load %arg5[%c0_95, %c21, %c0_96, %c0_97] : memref<1x27x4x4xbf16, #tpu.memory_space<vmem>>, vector<1x1x4x4xbf16>
    %111 = vector.shape_cast %110 : vector<1x1x4x4xbf16> to vector<4x4xbf16>
    %112 = vector.extract_strided_slice %5 {offsets = [0, 10], sizes = [4, 78], strides = [1, 1]} : vector<4x100xbf16> to vector<4x78xbf16>
    %cst_98 = arith.constant dense<0.000000e+00> : vector<4x78xf32>
    %113 = tpu.matmul %111, %112, %cst_98 {dimension_numbers = #tpu.dot_dimension_numbers<[1], [0], [0], [1], [0, 0, 1, 1], [], []>} : vector<4x4xbf16>, vector<4x78xbf16>, vector<4x78xf32> -> vector<4x78xf32>
    %114 = arith.addf %109, %113 : vector<4x78xf32>
    %c0_99 = arith.constant 0 : index
    %c22 = arith.constant 22 : index
    %c0_100 = arith.constant 0 : index
    %c0_101 = arith.constant 0 : index
    %115 = vector.load %arg5[%c0_99, %c22, %c0_100, %c0_101] : memref<1x27x4x4xbf16, #tpu.memory_space<vmem>>, vector<1x1x4x4xbf16>
    %116 = vector.shape_cast %115 : vector<1x1x4x4xbf16> to vector<4x4xbf16>
    %117 = vector.extract_strided_slice %5 {offsets = [0, 11], sizes = [4, 78], strides = [1, 1]} : vector<4x100xbf16> to vector<4x78xbf16>
    %cst_102 = arith.constant dense<0.000000e+00> : vector<4x78xf32>
    %118 = tpu.matmul %116, %117, %cst_102 {dimension_numbers = #tpu.dot_dimension_numbers<[1], [0], [0], [1], [0, 0, 1, 1], [], []>} : vector<4x4xbf16>, vector<4x78xbf16>, vector<4x78xf32> -> vector<4x78xf32>
    %119 = arith.addf %114, %118 : vector<4x78xf32>
    %c0_103 = arith.constant 0 : index
    %c23 = arith.constant 23 : index
    %c0_104 = arith.constant 0 : index
    %c0_105 = arith.constant 0 : index
    %120 = vector.load %arg5[%c0_103, %c23, %c0_104, %c0_105] : memref<1x27x4x4xbf16, #tpu.memory_space<vmem>>, vector<1x1x4x4xbf16>
    %121 = vector.shape_cast %120 : vector<1x1x4x4xbf16> to vector<4x4xbf16>
    %122 = vector.extract_strided_slice %5 {offsets = [0, 12], sizes = [4, 78], strides = [1, 1]} : vector<4x100xbf16> to vector<4x78xbf16>
    %cst_106 = arith.constant dense<0.000000e+00> : vector<4x78xf32>
    %123 = tpu.matmul %121, %122, %cst_106 {dimension_numbers = #tpu.dot_dimension_numbers<[1], [0], [0], [1], [0, 0, 1, 1], [], []>} : vector<4x4xbf16>, vector<4x78xbf16>, vector<4x78xf32> -> vector<4x78xf32>
    %124 = arith.addf %119, %123 : vector<4x78xf32>
    %c0_107 = arith.constant 0 : index
    %c24 = arith.constant 24 : index
    %c0_108 = arith.constant 0 : index
    %c0_109 = arith.constant 0 : index
    %125 = vector.load %arg5[%c0_107, %c24, %c0_108, %c0_109] : memref<1x27x4x4xbf16, #tpu.memory_space<vmem>>, vector<1x1x4x4xbf16>
    %126 = vector.shape_cast %125 : vector<1x1x4x4xbf16> to vector<4x4xbf16>
    %127 = vector.extract_strided_slice %5 {offsets = [0, 20], sizes = [4, 78], strides = [1, 1]} : vector<4x100xbf16> to vector<4x78xbf16>
    %cst_110 = arith.constant dense<0.000000e+00> : vector<4x78xf32>
    %128 = tpu.matmul %126, %127, %cst_110 {dimension_numbers = #tpu.dot_dimension_numbers<[1], [0], [0], [1], [0, 0, 1, 1], [], []>} : vector<4x4xbf16>, vector<4x78xbf16>, vector<4x78xf32> -> vector<4x78xf32>
    %129 = arith.addf %124, %128 : vector<4x78xf32>
    %c0_111 = arith.constant 0 : index
    %c25 = arith.constant 25 : index
    %c0_112 = arith.constant 0 : index
    %c0_113 = arith.constant 0 : index
    %130 = vector.load %arg5[%c0_111, %c25, %c0_112, %c0_113] : memref<1x27x4x4xbf16, #tpu.memory_space<vmem>>, vector<1x1x4x4xbf16>
    %131 = vector.shape_cast %130 : vector<1x1x4x4xbf16> to vector<4x4xbf16>
    %132 = vector.extract_strided_slice %5 {offsets = [0, 21], sizes = [4, 78], strides = [1, 1]} : vector<4x100xbf16> to vector<4x78xbf16>
    %cst_114 = arith.constant dense<0.000000e+00> : vector<4x78xf32>
    %133 = tpu.matmul %131, %132, %cst_114 {dimension_numbers = #tpu.dot_dimension_numbers<[1], [0], [0], [1], [0, 0, 1, 1], [], []>} : vector<4x4xbf16>, vector<4x78xbf16>, vector<4x78xf32> -> vector<4x78xf32>
    %134 = arith.addf %129, %133 : vector<4x78xf32>
    %c0_115 = arith.constant 0 : index
    %c26 = arith.constant 26 : index
    %c0_116 = arith.constant 0 : index
    %c0_117 = arith.constant 0 : index
    %135 = vector.load %arg5[%c0_115, %c26, %c0_116, %c0_117] : memref<1x27x4x4xbf16, #tpu.memory_space<vmem>>, vector<1x1x4x4xbf16>
    %136 = vector.shape_cast %135 : vector<1x1x4x4xbf16> to vector<4x4xbf16>
    %137 = vector.extract_strided_slice %5 {offsets = [0, 22], sizes = [4, 78], strides = [1, 1]} : vector<4x100xbf16> to vector<4x78xbf16>
    %cst_118 = arith.constant dense<0.000000e+00> : vector<4x78xf32>
    %138 = tpu.matmul %136, %137, %cst_118 {dimension_numbers = #tpu.dot_dimension_numbers<[1], [0], [0], [1], [0, 0, 1, 1], [], []>} : vector<4x4xbf16>, vector<4x78xbf16>, vector<4x78xf32> -> vector<4x78xf32>
    %139 = arith.addf %134, %138 : vector<4x78xf32>
    %c0_119 = arith.constant 0 : index
    %c0_120 = arith.constant 0 : index
    %c0_121 = arith.constant 0 : index
    %140 = vector.load %arg6[%c0_119, %c0_120, %c0_121] : memref<1x4x1xf32, #tpu.memory_space<vmem>>, vector<1x4x1xf32>
    %141 = vector.shape_cast %140 : vector<1x4x1xf32> to vector<4x1xf32>
    %142 = vector.broadcast %141 : vector<4x1xf32> to vector<4x78xf32>
    %143 = arith.addf %139, %142 : vector<4x78xf32>
    %c0_122 = arith.constant 0 : index
    %c0_123 = arith.constant 0 : index
    %c0_124 = arith.constant 0 : index
    %c0_125 = arith.constant 0 : index
    %144 = vector.load %arg7[%c0_122, %c0_123, %c0_124, %c0_125] : memref<1x1x4x78xf32, #tpu.memory_space<vmem>>, vector<1x1x4x78xf32>
    %145 = vector.shape_cast %144 : vector<1x1x4x78xf32> to vector<4x78xf32>
    %146 = vector.shape_cast %143 : vector<4x78xf32> to vector<1x1x4x78xf32>
    tpu.vector_store %arg7[%c0_122, %c0_123, %c0_124, %c0_125], %146 {strides = array<i32>} : memref<1x1x4x78xf32, #tpu.memory_space<vmem>>, vector<1x1x4x78xf32>,
    return
  }
  func.func @transform_0(%arg0: i32, %arg1: i32) -> (i32, i32, i32, i32) {
    %c0_i32 = arith.constant 0 : i32
    %0 = arith.addi %arg1, %c0_i32 : i32
    %c0_i32_0 = arith.constant 0 : i32
    %c0_i32_1 = arith.constant 0 : i32
    %c0_i32_2 = arith.constant 0 : i32
    return %arg0, %0, %c0_i32_0, %c0_i32_1 : i32, i32, i32, i32
  }
  func.func @transform_1(%arg0: i32, %arg1: i32) -> (i32, i32, i32, i32) {
    %c1_i32 = arith.constant 1 : i32
    %0 = arith.addi %arg1, %c1_i32 : i32
    %c0_i32 = arith.constant 0 : i32
    %c0_i32_0 = arith.constant 0 : i32
    %c0_i32_1 = arith.constant 0 : i32
    return %arg0, %0, %c0_i32, %c0_i32_0 : i32, i32, i32, i32
  }
  func.func @transform_2(%arg0: i32, %arg1: i32) -> (i32, i32, i32, i32) {
    %c2_i32 = arith.constant 2 : i32
    %0 = arith.addi %arg1, %c2_i32 : i32
    %c0_i32 = arith.constant 0 : i32
    %c0_i32_0 = arith.constant 0 : i32
    %c0_i32_1 = arith.constant 0 : i32
    return %arg0, %0, %c0_i32, %c0_i32_0 : i32, i32, i32, i32
  }
  func.func @transform_3(%arg0: i32, %arg1: i32) -> (i32, i32, i32, i32) {
    %c0_i32 = arith.constant 0 : i32
    %c0_i32_0 = arith.constant 0 : i32
    %c0_i32_1 = arith.constant 0 : i32
    %c0_i32_2 = arith.constant 0 : i32
    return %arg0, %c0_i32, %c0_i32_0, %c0_i32_1 : i32, i32, i32, i32
  }
  func.func @transform_4(%arg0: i32, %arg1: i32) -> (i32, i32, i32) {
    %c0_i32 = arith.constant 0 : i32
    %c0_i32_0 = arith.constant 0 : i32
    %c0_i32_1 = arith.constant 0 : i32
    return %arg0, %c0_i32, %c0_i32_0 : i32, i32, i32
  }
  func.func @transform_5(%arg0: i32, %arg1: i32) -> (i32, i32, i32, i32) {
    %c0_i32 = arith.constant 0 : i32
    %c0_i32_0 = arith.constant 0 : i32
    %c0_i32_1 = arith.constant 0 : i32
    return %arg0, %arg1, %c0_i32, %c0_i32_0 : i32, i32, i32, i32
  }
}

</mosaic_0001>

<llo_original>
// kernel: tpu_custom_call.1
$region0: #{tpu_custom_call.1}
  #allocation0 [shape = 'u32[]', space=smem, size = 0x4, offset = 0x4, fixed_abs, tag = 'smem constant byte address 0x4 - core index']
  #allocation1 [shape = 'u32[144,128]{1,0:T(1,128)}', space=vmem, size = 0x12000, scoped, tag = 'internal scratch']
  %s0 = inlined_call_operand.vmem [shape: bf16[2,10,4,100], index: 0, kind: input, shape index: {}]
  %s1 = inlined_call_operand.vmem [shape: bf16[2,10,4,100], index: 1, kind: input, shape index: {}]
  %s2 = inlined_call_operand.vmem [shape: bf16[2,10,4,100], index: 2, kind: input, shape index: {}]
  %s3 = inlined_call_operand.vmem [shape: bf16[2,27,4,4], index: 3, kind: input, shape index: {}]
  %s4 = inlined_call_operand.vmem [shape: f32[2,4,1], index: 4, kind: input, shape index: {}]
  %s5 = inlined_call_operand.hbm [shape: f32[2,8,4,78], index: 5, kind: output, shape index: {}]
  %s6 = sld [smem:[#allocation0]]
  $region53: #{tpu_custom_call.1} parent=0
    _
  %s8 = ssub.s32 1, %s6
  %s9 = scalar_select 0, %s8, %s6
  $region1: #{tpu_custom_call.1} parent=0
    #allocation2 [shape = 'u8[4096]{0}', space=vmem, size = 0x1000, scoped, tag = 'output window, operand 0']
    #allocation3 [shape = 's32[2]{0}', space=sflag, size = 0x8, scoped, tag = 'scoped memory for tpu_custom_call.1']
    %10 = vsyncpa [#allocation3], 0
    %s11 = scalar_lea.sflag [#allocation3], 1
    %12 = vsyncpa %s11, 0
    loop: start=0, step=1, limit=18
    $region2: #{tpu_custom_call.1} parent=1 // loop_pre_header
      _
    $region3: #{tpu_custom_call.1} parent=1 // loop_header
      %s14 = sphi 0, %s18
      %p15 = scmp.ge.s32.totalorder %s14, 18
      %s21 = sphi 0, %s33
      %s22 = sphi 0, %s29
      %s23 = sphi 0, %s21
      %s24 = sphi 0, %s22
      %s25 = sphi 0, %s23
      %s26 = sphi 0, %s24
      %s38 = sphi 0, %s40
      %s41 = sphi 0, %s38
      %s42 = sphi 0, %s41
      %s58 = sphi 0, %s42
      %s68 = sphi 0, %s70
      %s71 = sphi 0, %s68
      %s72 = sphi 0, %s71
      %s88 = sphi 0, %s72
      %s98 = sphi 0, %s100
      %s101 = sphi 0, %s98
      %s102 = sphi 0, %s101
      %s118 = sphi 0, %s102
      %s124 = sphi 0, %s126
      %s127 = sphi 0, %s124
      %s128 = sphi 0, %s127
      %s144 = sphi 0, %s128
      %s150 = sphi 0, %s152
      %s153 = sphi 0, %s150
      %s154 = sphi 0, %s153
      %s170 = sphi 0, %s154
      %s178 = sphi 0, %s180
      %s181 = sphi 0, %s178
      %s182 = sphi 0, %s181
      %s198 = sphi 0, %s182
    $region4: #{tpu_custom_call.1} parent=1 // loop_header_branch
      %17 = sbr.rel (%p15) target = $region8
    $region5: #{tpu_custom_call.1} parent=1 // loop_body
      %s19 = ssub.s32 %s14, 1
      %s20 = ssub.s32 %s14, 2
      %s27 = sadd.s32 1, %s22
      %p28 = scmp.ge.s32.totalorder %s27, 8
      %s29 = scalar_select %p28, 0, %s27
      %s30 = sadd.s32 1, %s21
      %s31 = scalar_select %p28, %s30, %s21
      %p32 = scmp.ge.s32.totalorder %s31, 2
      %s33 = scalar_select %p32, 0, %s31
      %s34 = ssub.s32 %s21, %s33
      %s35 = ssub.s32 %s22, %s29
      %s36 = sor.u32 %s34, %s35
      %p37 = scmp.eq.s32.totalorder %s36, 0
      %s39 = sadd.s32 %s38, 1
      %s40 = scalar_select %p37, %s38, %s39
      %p43 = pneg %p37
      %p44 = scmp.eq.s32.totalorder %s14, 15
      %p45 = por %p43, %p44
      %p46 = scmp.ne.s32.totalorder %s38, %s41
      %p47 = scmp.eq.s32.totalorder %s14, 0
      %p48 = por %p46, %p47
      %p49 = scmp.ne.s32.totalorder %s38, %s41
      %p50 = scmp.eq.s32.totalorder %s19, 15
      %p51 = por %p49, %p50
      %p52 = scmp.ne.s32.totalorder %s41, %s42
      %p53 = scmp.eq.s32.totalorder %s19, 0
      %p54 = por %p52, %p53
      %p55 = scmp.ne.s32.totalorder %s41, %s42
      %p56 = scmp.eq.s32.totalorder %s20, 15
      %p57 = por %p55, %p56
      %p59 = scmp.ne.s32.totalorder %s42, %s58
      %p60 = scmp.eq.s32.totalorder %s20, 0
      %p61 = por %p59, %p60
      %s62 = sadd.s32 %s22, 1
      %s63 = sadd.s32 %s29, 1
      %s64 = ssub.s32 %s21, %s33
      %s65 = ssub.s32 %s62, %s63
      %s66 = sor.u32 %s64, %s65
      %p67 = scmp.eq.s32.totalorder %s66, 0
      %s69 = sadd.s32 %s68, 1
      %s70 = scalar_select %p67, %s68, %s69
      %p73 = pneg %p67
      %p74 = scmp.eq.s32.totalorder %s14, 15
      %p75 = por %p73, %p74
      %p76 = scmp.ne.s32.totalorder %s68, %s71
      %p77 = scmp.eq.s32.totalorder %s14, 0
      %p78 = por %p76, %p77
      %p79 = scmp.ne.s32.totalorder %s68, %s71
      %p80 = scmp.eq.s32.totalorder %s19, 15
      %p81 = por %p79, %p80
      %p82 = scmp.ne.s32.totalorder %s71, %s72
      %p83 = scmp.eq.s32.totalorder %s19, 0
      %p84 = por %p82, %p83
      %p85 = scmp.ne.s32.totalorder %s71, %s72
      %p86 = scmp.eq.s32.totalorder %s20, 15
      %p87 = por %p85, %p86
      %p89 = scmp.ne.s32.totalorder %s72, %s88
      %p90 = scmp.eq.s32.totalorder %s20, 0
      %p91 = por %p89, %p90
      %s92 = sadd.s32 %s22, 2
      %s93 = sadd.s32 %s29, 2
      %s94 = ssub.s32 %s21, %s33
      %s95 = ssub.s32 %s92, %s93
      %s96 = sor.u32 %s94, %s95
      %p97 = scmp.eq.s32.totalorder %s96, 0
      %s99 = sadd.s32 %s98, 1
      %s100 = scalar_select %p97, %s98, %s99
      %p103 = pneg %p97
      %p104 = scmp.eq.s32.totalorder %s14, 15
      %p105 = por %p103, %p104
      %p106 = scmp.ne.s32.totalorder %s98, %s101
      %p107 = scmp.eq.s32.totalorder %s14, 0
      %p108 = por %p106, %p107
      %p109 = scmp.ne.s32.totalorder %s98, %s101
      %p110 = scmp.eq.s32.totalorder %s19, 15
      %p111 = por %p109, %p110
      %p112 = scmp.ne.s32.totalorder %s101, %s102
      %p113 = scmp.eq.s32.totalorder %s19, 0
      %p114 = por %p112, %p113
      %p115 = scmp.ne.s32.totalorder %s101, %s102
      %p116 = scmp.eq.s32.totalorder %s20, 15
      %p117 = por %p115, %p116
      %p119 = scmp.ne.s32.totalorder %s102, %s118
      %p120 = scmp.eq.s32.totalorder %s20, 0
      %p121 = por %p119, %p120
      %s122 = ssub.s32 %s21, %s33
      %p123 = scmp.eq.s32.totalorder %s122, 0
      %s125 = sadd.s32 %s124, 1
      %s126 = scalar_select %p123, %s124, %s125
      %p129 = pneg %p123
      %p130 = scmp.eq.s32.totalorder %s14, 15
      %p131 = por %p129, %p130
      %p132 = scmp.ne.s32.totalorder %s124, %s127
      %p133 = scmp.eq.s32.totalorder %s14, 0
      %p134 = por %p132, %p133
      %p135 = scmp.ne.s32.totalorder %s124, %s127
      %p136 = scmp.eq.s32.totalorder %s19, 15
      %p137 = por %p135, %p136
      %p138 = scmp.ne.s32.totalorder %s127, %s128
      %p139 = scmp.eq.s32.totalorder %s19, 0
      %p140 = por %p138, %p139
      %p141 = scmp.ne.s32.totalorder %s127, %s128
      %p142 = scmp.eq.s32.totalorder %s20, 15
      %p143 = por %p141, %p142
      %p145 = scmp.ne.s32.totalorder %s128, %s144
      %p146 = scmp.eq.s32.totalorder %s20, 0
      %p147 = por %p145, %p146
      %s148 = ssub.s32 %s21, %s33
      %p149 = scmp.eq.s32.totalorder %s148, 0
      %s151 = sadd.s32 %s150, 1
      %s152 = scalar_select %p149, %s150, %s151
      %p155 = pneg %p149
      %p156 = scmp.eq.s32.totalorder %s14, 15
      %p157 = por %p155, %p156
      %p158 = scmp.ne.s32.totalorder %s150, %s153
      %p159 = scmp.eq.s32.totalorder %s14, 0
      %p160 = por %p158, %p159
      %p161 = scmp.ne.s32.totalorder %s150, %s153
      %p162 = scmp.eq.s32.totalorder %s19, 15
      %p163 = por %p161, %p162
      %p164 = scmp.ne.s32.totalorder %s153, %s154
      %p165 = scmp.eq.s32.totalorder %s19, 0
      %p166 = por %p164, %p165
      %p167 = scmp.ne.s32.totalorder %s153, %s154
      %p168 = scmp.eq.s32.totalorder %s20, 15
      %p169 = por %p167, %p168
      %p171 = scmp.ne.s32.totalorder %s154, %s170
      %p172 = scmp.eq.s32.totalorder %s20, 0
      %p173 = por %p171, %p172
      %s174 = ssub.s32 %s21, %s33
      %s175 = ssub.s32 %s22, %s29
      %s176 = sor.u32 %s174, %s175
      %p177 = scmp.eq.s32.totalorder %s176, 0
      %s179 = sadd.s32 %s178, 1
      %s180 = scalar_select %p177, %s178, %s179
      %p183 = pneg %p177
      %p184 = scmp.eq.s32.totalorder %s14, 15
      %p185 = por %p183, %p184
      %p186 = scmp.ne.s32.totalorder %s178, %s181
      %p187 = scmp.eq.s32.totalorder %s14, 0
      %p188 = por %p186, %p187
      %p189 = scmp.ne.s32.totalorder %s178, %s181
      %p190 = scmp.eq.s32.totalorder %s19, 15
      %p191 = por %p189, %p190
      %p192 = scmp.ne.s32.totalorder %s181, %s182
      %p193 = scmp.eq.s32.totalorder %s19, 0
      %p194 = por %p192, %p193
      %p195 = scmp.ne.s32.totalorder %s181, %s182
      %p196 = scmp.eq.s32.totalorder %s20, 15
      %p197 = por %p195, %p196
      %p199 = scmp.ne.s32.totalorder %s182, %s198
      %p200 = scmp.eq.s32.totalorder %s20, 0
      %p201 = por %p199, %p200
      %p202 = scmp.le.s32.totalorder 1, %s14
      %p203 = scmp.lt.s32.totalorder %s14, 17
      %p204 = pnand %p202, %p203
      %p205 = pneg %p204
      // Predicated region
      $region9: #{tpu_custom_call.1} parent=5 // pred_check
        _
      $region10: #{tpu_custom_call.1} parent=5 // pred_check_branch
        %207 = sbr.rel (%p204) target = $region12
      $region11: #{tpu_custom_call.1} parent=5 // pred_region
        %s208 = ssub.s32 %s14, 1
      $region12: #{tpu_custom_call.1} parent=5 // pred_fallthru
        _
      %p209 = scmp.lt.s32.totalorder %s14, 16
      // Predicated region
      $region13: #{tpu_custom_call.1} parent=5 // pred_check
        %p210 = pneg %p209
      $region14: #{tpu_custom_call.1} parent=5 // pred_check_branch
        %212 = sbr.rel (%p210) target = $region16
      $region15: #{tpu_custom_call.1} parent=5 // pred_region
        // Predicated region
        $region17: #{tpu_custom_call.1} parent=15 // pred_check
          %p213 = pneg %p48
        $region18: #{tpu_custom_call.1} parent=15 // pred_check_branch
          %215 = sbr.rel (%p213) target = $region20
        $region19: #{tpu_custom_call.1} parent=15 // pred_region
          %p216 = scmp.lt.s32.totalorder %s21, 1
          %s217 = scalar_select %p216, %s21, 1
          %p218 = scmp.lt.s32.totalorder %s22, 9
          %s219 = scalar_select %p218, %s22, 9
          %s220 = smul.addr %s217, 10
          %s221 = sadd.s32 %s219, %s220
          %s222 = smul.addr %s221, 2
          %s223 = scalar_lea.vmem %s0, %s222
        $region20: #{tpu_custom_call.1} parent=15 // pred_fallthru
          _
        // Predicated region
        $region21: #{tpu_custom_call.1} parent=15 // pred_check
          %p224 = pneg %p78
        $region22: #{tpu_custom_call.1} parent=15 // pred_check_branch
          %226 = sbr.rel (%p224) target = $region24
        $region23: #{tpu_custom_call.1} parent=15 // pred_region
          %s227 = sadd.s32 %s22, 1
          %p228 = scmp.lt.s32.totalorder %s21, 1
          %s229 = scalar_select %p228, %s21, 1
          %p230 = scmp.lt.s32.totalorder %s227, 9
          %s231 = scalar_select %p230, %s227, 9
          %s232 = smul.addr %s229, 10
          %s233 = sadd.s32 %s231, %s232
          %s234 = smul.addr %s233, 2
          %s235 = scalar_lea.vmem %s1, %s234
          %s236 = sadd.s32 %s22, 1
        $region24: #{tpu_custom_call.1} parent=15 // pred_fallthru
          _
        // Predicated region
        $region25: #{tpu_custom_call.1} parent=15 // pred_check
          %p237 = pneg %p108
        $region26: #{tpu_custom_call.1} parent=15 // pred_check_branch
          %239 = sbr.rel (%p237) target = $region28
        $region27: #{tpu_custom_call.1} parent=15 // pred_region
          %s240 = sadd.s32 %s22, 2
          %p241 = scmp.lt.s32.totalorder %s21, 1
          %s242 = scalar_select %p241, %s21, 1
          %p243 = scmp.lt.s32.totalorder %s240, 9
          %s244 = scalar_select %p243, %s240, 9
          %s245 = smul.addr %s242, 10
          %s246 = sadd.s32 %s244, %s245
          %s247 = smul.addr %s246, 2
          %s248 = scalar_lea.vmem %s2, %s247
          %s249 = sadd.s32 %s22, 2
        $region28: #{tpu_custom_call.1} parent=15 // pred_fallthru
          _
        // Predicated region
        $region29: #{tpu_custom_call.1} parent=15 // pred_check
          %p250 = pneg %p134
        $region30: #{tpu_custom_call.1} parent=15 // pred_check_branch
          %252 = sbr.rel (%p250) target = $region32
        $region31: #{tpu_custom_call.1} parent=15 // pred_region
          %p253 = scmp.lt.s32.totalorder %s21, 1
          %s254 = scalar_select %p253, %s21, 1
          %s255 = smul.addr %s254, 27
          %s256 = smul.addr %s255, 2
          %s257 = scalar_lea.vmem %s3, %s256
        $region32: #{tpu_custom_call.1} parent=15 // pred_fallthru
          _
        // Predicated region
        $region33: #{tpu_custom_call.1} parent=15 // pred_check
          %p258 = pneg %p160
        $region34: #{tpu_custom_call.1} parent=15 // pred_check_branch
          %260 = sbr.rel (%p258) target = $region36
        $region35: #{tpu_custom_call.1} parent=15 // pred_region
          %p261 = scmp.lt.s32.totalorder %s21, 1
          %s262 = scalar_select %p261, %s21, 1
          %s263 = smul.addr %s262, 4
          %s264 = scalar_lea.vmem %s4, %s263
        $region36: #{tpu_custom_call.1} parent=15 // pred_fallthru
          _
      $region16: #{tpu_custom_call.1} parent=5 // pred_fallthru
        _
      %p265 = scmp.le.s32.totalorder 1, %s14
      %p266 = scmp.lt.s32.totalorder %s14, 17
      %p267 = pnand %p265, %p266
      %p268 = pneg %p267
      // Predicated region
      $region37: #{tpu_custom_call.1} parent=5 // pred_check
        _
      $region38: #{tpu_custom_call.1} parent=5 // pred_check_branch
        %270 = sbr.rel (%p267) target = $region40
      $region39: #{tpu_custom_call.1} parent=5 // pred_region
        %s271 = ssub.s32 %s14, 1
        %p272 = scmp.lt.s32.totalorder %s23, 1
        %s273 = scalar_select %p272, %s23, 1
        %p274 = scmp.lt.s32.totalorder %s24, 9
        %s275 = scalar_select %p274, %s24, 9
        %s276 = smul.addr %s273, 10
        %s277 = sadd.s32 %s275, %s276
        %s278 = smul.addr %s277, 2
        %s279 = scalar_lea.vmem %s0, %s278
        %p280 = pneg %p54
        %p281 = pneg %p51
        %s282 = sadd.s32 %s24, 1
        %p283 = scmp.lt.s32.totalorder %s23, 1
        %s284 = scalar_select %p283, %s23, 1
        %p285 = scmp.lt.s32.totalorder %s282, 9
        %s286 = scalar_select %p285, %s282, 9
        %s287 = smul.addr %s284, 10
        %s288 = sadd.s32 %s286, %s287
        %s289 = smul.addr %s288, 2
        %s290 = scalar_lea.vmem %s1, %s289
        %p291 = pneg %p84
        %p292 = pneg %p81
        %s293 = sadd.s32 %s24, 2
        %p294 = scmp.lt.s32.totalorder %s23, 1
        %s295 = scalar_select %p294, %s23, 1
        %p296 = scmp.lt.s32.totalorder %s293, 9
        %s297 = scalar_select %p296, %s293, 9
        %s298 = smul.addr %s295, 10
        %s299 = sadd.s32 %s297, %s298
        %s300 = smul.addr %s299, 2
        %s301 = scalar_lea.vmem %s2, %s300
        %p302 = pneg %p114
        %p303 = pneg %p111
        %p304 = scmp.lt.s32.totalorder %s23, 1
        %s305 = scalar_select %p304, %s23, 1
        %s306 = smul.addr %s305, 27
        %s307 = smul.addr %s306, 2
        %s308 = scalar_lea.vmem %s3, %s307
        %p309 = pneg %p140
        %p310 = pneg %p137
        %p311 = scmp.lt.s32.totalorder %s23, 1
        %s312 = scalar_select %p311, %s23, 1
        %s313 = smul.addr %s312, 4
        %s314 = scalar_lea.vmem %s4, %s313
        %p315 = pneg %p166
        %p316 = pneg %p163
        %p317 = pneg %p194
        %p318 = pneg %p191
        %s319 = sand.u32 %s181, 1
        %s320 = scalar_lea.sflag [#allocation3], %s319
        %s321 = sand.u32 %s181, 1
        %s322 = smul.addr %s321, 4
        %s323 = scalar_lea.vmem [#allocation2], %s322
        %p324 = scmp.lt.s32.totalorder %s23, 1
        %s325 = scalar_select %p324, %s23, 1
        %p326 = scmp.lt.s32.totalorder %s24, 9
        %s327 = scalar_select %p326, %s24, 9
        %s328 = smul.addr %s325, 10
        %s329 = sadd.s32 %s327, %s328
        %s330 = smul.addr %s329, 2
        %s331 = scalar_lea.vmem %s0, %s330
        %s332 = sadd.s32 %s24, 1
        %p333 = scmp.lt.s32.totalorder %s23, 1
        %s334 = scalar_select %p333, %s23, 1
        %p335 = scmp.lt.s32.totalorder %s332, 9
        %s336 = scalar_select %p335, %s332, 9
        %s337 = smul.addr %s334, 10
        %s338 = sadd.s32 %s336, %s337
        %s339 = smul.addr %s338, 2
        %s340 = scalar_lea.vmem %s1, %s339
        %s341 = sadd.s32 %s24, 1
        %s342 = sadd.s32 %s24, 2
        %p343 = scmp.lt.s32.totalorder %s23, 1
        %s344 = scalar_select %p343, %s23, 1
        %p345 = scmp.lt.s32.totalorder %s342, 9
        %s346 = scalar_select %p345, %s342, 9
        %s347 = smul.addr %s344, 10
        %s348 = sadd.s32 %s346, %s347
        %s349 = smul.addr %s348, 2
        %s350 = scalar_lea.vmem %s2, %s349
        %s351 = sadd.s32 %s24, 2
        %p352 = scmp.lt.s32.totalorder %s23, 1
        %s353 = scalar_select %p352, %s23, 1
        %s354 = smul.addr %s353, 27
        %s355 = smul.addr %s354, 2
        %s356 = scalar_lea.vmem %s3, %s355
        %p357 = scmp.lt.s32.totalorder %s23, 1
        %s358 = scalar_select %p357, %s23, 1
        %s359 = smul.addr %s358, 4
        %s360 = scalar_lea.vmem %s4, %s359
        %v362 = vld [vmem:[%s331] sm:$0x3]
        %v363 = vld [vmem:[%s340] sm:$0x3]
        %v364 = vld [vmem:[%s350] sm:$0x3]
        %v365 = vld [vmem:[%s356] sm:$0x3]
        %s366 = scalar_lea.vmem %s356, 2
        %v367 = vld [vmem:[%s366] sm:$0x3]
        %v370 = vunpack.c.l.s4 1983009808
        %v371 = vunpack.c.0.s8 %v370
        %v372 = vlaneseq
        %v373 = vshrl.u32 %v372, 7
        %v374 = vsub.s32 %v371, %v373
        %v375 = vrot.slane %v362, %v374
        %376 = vrot.lane.b32.xlu0 %v375, 127
        %v377 = vpop.permute.xlu0 %376
        %vm378 = vcmask 31744
        %v380 = vsel %vm378, %v367, 0
        %vm382 = vcmask 1041408
        %v384 = vsel %vm382, %v377, 0
        %386 = vmatprep.subr.bf16.mxu0 0
        %387 = vmatpush1.bf16.msra.mxu0 %v384
        %388 = vmatprep.subr.bf16.mxu0 0
        %389 = vmatpush1.bf16.msra.mxu0 0
        %390 = vmatprep.subr.bf16.mxu0 0
        %391 = vmatpush1.bf16.msra.mxu0 0
        %392 = vmatprep.subr.bf16.mxu0 0
        %393 = vmatpush1.bf16.msra.mxu0 0
        %394 = vmatprep.subr.bf16.mxu0 0
        %395 = vmatpush1.bf16.msra.mxu0 0
        %396 = vmatprep.subr.bf16.mxu0 0
        %397 = vmatpush1.bf16.msra.mxu0 0
        %398 = vmatprep.subr.bf16.mxu0 0
        %399 = vmatpush1.bf16.msra.mxu0 0
        %400 = vmatprep.subr.bf16.mxu0 0
        %401 = vmatpush1.bf16.msra.mxu0 0
        %402 = vmatprep.subr.bf16.mxu0 0
        %403 = vmatpush1.bf16.msra.mxu0 0
        %404 = vmatprep.subr.bf16.mxu0 0
        %405 = vmatpush1.bf16.msra.mxu0 0
        %406 = vmatprep.subr.bf16.mxu0 0
        %407 = vmatpush1.bf16.msra.mxu0 0
        %408 = vmatprep.subr.bf16.mxu0 0
        %409 = vmatpush1.bf16.msra.mxu0 0
        %410 = vmatprep.subr.bf16.mxu0 0
        %411 = vmatpush1.bf16.msra.mxu0 0
        %412 = vmatprep.subr.bf16.mxu0 0
        %413 = vmatpush1.bf16.msra.mxu0 0
        %414 = vmatprep.subr.bf16.mxu0 0
        %415 = vmatpush1.bf16.msra.mxu0 0
        %416 = vmatprep.subr.bf16.mxu0 0
        %417 = vmatpush1.bf16.msra.mxu0 0
        %418 = vmatprep.mubr.bf16.mxu0 0
        %419 = vmatmul.mubr.bf16.gmra.mrb[0].mxu0 %v380
        %v420 = vpop.f32.mrb[0].mxu0
        %v421 = vadd.f32 0.0, %v420
        %v422 = vpop.f32.mrb[0].mxu0
        %v423 = vpop.f32.mrb[0].mxu0
        %v424 = vpop.f32.mrb[0].mxu0
        %425 = vdwg.mxu0
        %v427 = vsel %vm378, %v365, 0
        %v430 = vsel %vm382, %v362, 0
        %432 = vmatprep.subr.bf16.mxu0 0
        %433 = vmatpush1.bf16.msra.mxu0 %v430
        %434 = vmatprep.subr.bf16.mxu0 0
        %435 = vmatpush1.bf16.msra.mxu0 0
        %436 = vmatprep.subr.bf16.mxu0 0
        %437 = vmatpush1.bf16.msra.mxu0 0
        %438 = vmatprep.subr.bf16.mxu0 0
        %439 = vmatpush1.bf16.msra.mxu0 0
        %440 = vmatprep.subr.bf16.mxu0 0
        %441 = vmatpush1.bf16.msra.mxu0 0
        %442 = vmatprep.subr.bf16.mxu0 0
        %443 = vmatpush1.bf16.msra.mxu0 0
        %444 = vmatprep.subr.bf16.mxu0 0
        %445 = vmatpush1.bf16.msra.mxu0 0
        %446 = vmatprep.subr.bf16.mxu0 0
        %447 = vmatpush1.bf16.msra.mxu0 0
        %448 = vmatprep.subr.bf16.mxu0 0
        %449 = vmatpush1.bf16.msra.mxu0 0
        %450 = vmatprep.subr.bf16.mxu0 0
        %451 = vmatpush1.bf16.msra.mxu0 0
        %452 = vmatprep.subr.bf16.mxu0 0
        %453 = vmatpush1.bf16.msra.mxu0 0
        %454 = vmatprep.subr.bf16.mxu0 0
        %455 = vmatpush1.bf16.msra.mxu0 0
        %456 = vmatprep.subr.bf16.mxu0 0
        %457 = vmatpush1.bf16.msra.mxu0 0
        %458 = vmatprep.subr.bf16.mxu0 0
        %459 = vmatpush1.bf16.msra.mxu0 0
        %460 = vmatprep.subr.bf16.mxu0 0
        %461 = vmatpush1.bf16.msra.mxu0 0
        %462 = vmatprep.subr.bf16.mxu0 0
        %463 = vmatpush1.bf16.msra.mxu0 0
        %464 = vmatprep.mubr.bf16.mxu0 0
        %465 = vmatmul.mubr.bf16.gmra.mrb[0].mxu0 %v427
        %v466 = vpop.f32.mrb[0].mxu0
        %v467 = vadd.f32 %v421, %v466
        %v468 = vpop.f32.mrb[0].mxu0
        %v469 = vpop.f32.mrb[0].mxu0
        %v470 = vpop.f32.mrb[0].mxu0
        %471 = vdwg.mxu0
        %s472 = scalar_lea.vmem %s356, 4
        %v473 = vld [vmem:[%s472] sm:$0x3]
        %474 = vrot.lane.b32.xlu0 %v375, 126
        %v475 = vpop.permute.xlu0 %474
        %v477 = vsel %vm378, %v473, 0
        %v480 = vsel %vm382, %v475, 0
        %482 = vmatprep.subr.bf16.mxu0 0
        %483 = vmatpush1.bf16.msra.mxu0 %v480
        %484 = vmatprep.subr.bf16.mxu0 0
        %485 = vmatpush1.bf16.msra.mxu0 0
        %486 = vmatprep.subr.bf16.mxu0 0
        %487 = vmatpush1.bf16.msra.mxu0 0
        %488 = vmatprep.subr.bf16.mxu0 0
        %489 = vmatpush1.bf16.msra.mxu0 0
        %490 = vmatprep.subr.bf16.mxu0 0
        %491 = vmatpush1.bf16.msra.mxu0 0
        %492 = vmatprep.subr.bf16.mxu0 0
        %493 = vmatpush1.bf16.msra.mxu0 0
        %494 = vmatprep.subr.bf16.mxu0 0
        %495 = vmatpush1.bf16.msra.mxu0 0
        %496 = vmatprep.subr.bf16.mxu0 0
        %497 = vmatpush1.bf16.msra.mxu0 0
        %498 = vmatprep.subr.bf16.mxu0 0
        %499 = vmatpush1.bf16.msra.mxu0 0
        %500 = vmatprep.subr.bf16.mxu0 0
        %501 = vmatpush1.bf16.msra.mxu0 0
        %502 = vmatprep.subr.bf16.mxu0 0
        %503 = vmatpush1.bf16.msra.mxu0 0
        %504 = vmatprep.subr.bf16.mxu0 0
        %505 = vmatpush1.bf16.msra.mxu0 0
        %506 = vmatprep.subr.bf16.mxu0 0
        %507 = vmatpush1.bf16.msra.mxu0 0
        %508 = vmatprep.subr.bf16.mxu0 0
        %509 = vmatpush1.bf16.msra.mxu0 0
        %510 = vmatprep.subr.bf16.mxu0 0
        %511 = vmatpush1.bf16.msra.mxu0 0
        %512 = vmatprep.subr.bf16.mxu0 0
        %513 = vmatpush1.bf16.msra.mxu0 0
        %514 = vmatprep.mubr.bf16.mxu0 0
        %515 = vmatmul.mubr.bf16.gmra.mrb[0].mxu0 %v477
        %v516 = vpop.f32.mrb[0].mxu0
        %v517 = vadd.f32 0.0, %v516
        %v518 = vpop.f32.mrb[0].mxu0
        %v519 = vpop.f32.mrb[0].mxu0
        %v520 = vpop.f32.mrb[0].mxu0
        %521 = vdwg.mxu0
        %v522 = vadd.f32 %v467, %v517
        %s523 = scalar_lea.vmem %s356, 6
        %v524 = vld [vmem:[%s523] sm:$0x3]
        %525 = vrot.lane.b32.xlu0 %v375, 118
        %v526 = vpop.permute.xlu0 %525
        %v528 = vsel %vm378, %v524, 0
        %v531 = vsel %vm382, %v526, 0
        %533 = vmatprep.subr.bf16.mxu0 0
        %534 = vmatpush1.bf16.msra.mxu0 %v531
        %535 = vmatprep.subr.bf16.mxu0 0
        %536 = vmatpush1.bf16.msra.mxu0 0
        %537 = vmatprep.subr.bf16.mxu0 0
        %538 = vmatpush1.bf16.msra.mxu0 0
        %539 = vmatprep.subr.bf16.mxu0 0
        %540 = vmatpush1.bf16.msra.mxu0 0
        %541 = vmatprep.subr.bf16.mxu0 0
        %542 = vmatpush1.bf16.msra.mxu0 0
        %543 = vmatprep.subr.bf16.mxu0 0
        %544 = vmatpush1.bf16.msra.mxu0 0
        %545 = vmatprep.subr.bf16.mxu0 0
        %546 = vmatpush1.bf16.msra.mxu0 0
        %547 = vmatprep.subr.bf16.mxu0 0
        %548 = vmatpush1.bf16.msra.mxu0 0
        %549 = vmatprep.subr.bf16.mxu0 0
        %550 = vmatpush1.bf16.msra.mxu0 0
        %551 = vmatprep.subr.bf16.mxu0 0
        %552 = vmatpush1.bf16.msra.mxu0 0
        %553 = vmatprep.subr.bf16.mxu0 0
        %554 = vmatpush1.bf16.msra.mxu0 0
        %555 = vmatprep.subr.bf16.mxu0 0
        %556 = vmatpush1.bf16.msra.mxu0 0
        %557 = vmatprep.subr.bf16.mxu0 0
        %558 = vmatpush1.bf16.msra.mxu0 0
        %559 = vmatprep.subr.bf16.mxu0 0
        %560 = vmatpush1.bf16.msra.mxu0 0
        %561 = vmatprep.subr.bf16.mxu0 0
        %562 = vmatpush1.bf16.msra.mxu0 0
        %563 = vmatprep.subr.bf16.mxu0 0
        %564 = vmatpush1.bf16.msra.mxu0 0
        %565 = vmatprep.mubr.bf16.mxu0 0
        %566 = vmatmul.mubr.bf16.gmra.mrb[0].mxu0 %v528
        %v567 = vpop.f32.mrb[0].mxu0
        %v568 = vadd.f32 0.0, %v567
        %v569 = vpop.f32.mrb[0].mxu0
        %v570 = vpop.f32.mrb[0].mxu0
        %v571 = vpop.f32.mrb[0].mxu0
        %572 = vdwg.mxu0
        %v573 = vadd.f32 %v522, %v568
        %s574 = scalar_lea.vmem %s356, 8
        %v575 = vld [vmem:[%s574] sm:$0x3]
        %576 = vrot.lane.b32.xlu0 %v375, 117
        %v577 = vpop.permute.xlu0 %576
        %v579 = vsel %vm378, %v575, 0
        %v582 = vsel %vm382, %v577, 0
        %584 = vmatprep.subr.bf16.mxu0 0
        %585 = vmatpush1.bf16.msra.mxu0 %v582
        %586 = vmatprep.subr.bf16.mxu0 0
        %587 = vmatpush1.bf16.msra.mxu0 0
        %588 = vmatprep.subr.bf16.mxu0 0
        %589 = vmatpush1.bf16.msra.mxu0 0
        %590 = vmatprep.subr.bf16.mxu0 0
        %591 = vmatpush1.bf16.msra.mxu0 0
        %592 = vmatprep.subr.bf16.mxu0 0
        %593 = vmatpush1.bf16.msra.mxu0 0
        %594 = vmatprep.subr.bf16.mxu0 0
        %595 = vmatpush1.bf16.msra.mxu0 0
        %596 = vmatprep.subr.bf16.mxu0 0
        %597 = vmatpush1.bf16.msra.mxu0 0
        %598 = vmatprep.subr.bf16.mxu0 0
        %599 = vmatpush1.bf16.msra.mxu0 0
        %600 = vmatprep.subr.bf16.mxu0 0
        %601 = vmatpush1.bf16.msra.mxu0 0
        %602 = vmatprep.subr.bf16.mxu0 0
        %603 = vmatpush1.bf16.msra.mxu0 0
        %604 = vmatprep.subr.bf16.mxu0 0
        %605 = vmatpush1.bf16.msra.mxu0 0
        %606 = vmatprep.subr.bf16.mxu0 0
        %607 = vmatpush1.bf16.msra.mxu0 0
        %608 = vmatprep.subr.bf16.mxu0 0
        %609 = vmatpush1.bf16.msra.mxu0 0
        %610 = vmatprep.subr.bf16.mxu0 0
        %611 = vmatpush1.bf16.msra.mxu0 0
        %612 = vmatprep.subr.bf16.mxu0 0
        %613 = vmatpush1.bf16.msra.mxu0 0
        %614 = vmatprep.subr.bf16.mxu0 0
        %615 = vmatpush1.bf16.msra.mxu0 0
        %616 = vmatprep.mubr.bf16.mxu0 0
        %617 = vmatmul.mubr.bf16.gmra.mrb[0].mxu0 %v579
        %v618 = vpop.f32.mrb[0].mxu0
        %v619 = vadd.f32 0.0, %v618
        %v620 = vpop.f32.mrb[0].mxu0
        %v621 = vpop.f32.mrb[0].mxu0
        %v622 = vpop.f32.mrb[0].mxu0
        %623 = vdwg.mxu0
        %v624 = vadd.f32 %v573, %v619
        %s625 = scalar_lea.vmem %s356, 10
        %v626 = vld [vmem:[%s625] sm:$0x3]
        %627 = vrot.lane.b32.xlu0 %v375, 116
        %v628 = vpop.permute.xlu0 %627
        %v630 = vsel %vm378, %v626, 0
        %v633 = vsel %vm382, %v628, 0
        %635 = vmatprep.subr.bf16.mxu0 0
        %636 = vmatpush1.bf16.msra.mxu0 %v633
        %637 = vmatprep.subr.bf16.mxu0 0
        %638 = vmatpush1.bf16.msra.mxu0 0
        %639 = vmatprep.subr.bf16.mxu0 0
        %640 = vmatpush1.bf16.msra.mxu0 0
        %641 = vmatprep.subr.bf16.mxu0 0
        %642 = vmatpush1.bf16.msra.mxu0 0
        %643 = vmatprep.subr.bf16.mxu0 0
        %644 = vmatpush1.bf16.msra.mxu0 0
        %645 = vmatprep.subr.bf16.mxu0 0
        %646 = vmatpush1.bf16.msra.mxu0 0
        %647 = vmatprep.subr.bf16.mxu0 0
        %648 = vmatpush1.bf16.msra.mxu0 0
        %649 = vmatprep.subr.bf16.mxu0 0
        %650 = vmatpush1.bf16.msra.mxu0 0
        %651 = vmatprep.subr.bf16.mxu0 0
        %652 = vmatpush1.bf16.msra.mxu0 0
        %653 = vmatprep.subr.bf16.mxu0 0
        %654 = vmatpush1.bf16.msra.mxu0 0
        %655 = vmatprep.subr.bf16.mxu0 0
        %656 = vmatpush1.bf16.msra.mxu0 0
        %657 = vmatprep.subr.bf16.mxu0 0
        %658 = vmatpush1.bf16.msra.mxu0 0
        %659 = vmatprep.subr.bf16.mxu0 0
        %660 = vmatpush1.bf16.msra.mxu0 0
        %661 = vmatprep.subr.bf16.mxu0 0
        %662 = vmatpush1.bf16.msra.mxu0 0
        %663 = vmatprep.subr.bf16.mxu0 0
        %664 = vmatpush1.bf16.msra.mxu0 0
        %665 = vmatprep.subr.bf16.mxu0 0
        %666 = vmatpush1.bf16.msra.mxu0 0
        %667 = vmatprep.mubr.bf16.mxu0 0
        %668 = vmatmul.mubr.bf16.gmra.mrb[0].mxu0 %v630
        %v669 = vpop.f32.mrb[0].mxu0
        %v670 = vadd.f32 0.0, %v669
        %v671 = vpop.f32.mrb[0].mxu0
        %v672 = vpop.f32.mrb[0].mxu0
        %v673 = vpop.f32.mrb[0].mxu0
        %674 = vdwg.mxu0
        %v675 = vadd.f32 %v624, %v670
        %s676 = scalar_lea.vmem %s356, 12
        %v677 = vld [vmem:[%s676] sm:$0x3]
        %678 = vrot.lane.b32.xlu0 %v375, 108
        %v679 = vpop.permute.xlu0 %678
        %v681 = vsel %vm378, %v677, 0
        %v684 = vsel %vm382, %v679, 0
        %686 = vmatprep.subr.bf16.mxu0 0
        %687 = vmatpush1.bf16.msra.mxu0 %v684
        %688 = vmatprep.subr.bf16.mxu0 0
        %689 = vmatpush1.bf16.msra.mxu0 0
        %690 = vmatprep.subr.bf16.mxu0 0
        %691 = vmatpush1.bf16.msra.mxu0 0
        %692 = vmatprep.subr.bf16.mxu0 0
        %693 = vmatpush1.bf16.msra.mxu0 0
        %694 = vmatprep.subr.bf16.mxu0 0
        %695 = vmatpush1.bf16.msra.mxu0 0
        %696 = vmatprep.subr.bf16.mxu0 0
        %697 = vmatpush1.bf16.msra.mxu0 0
        %698 = vmatprep.subr.bf16.mxu0 0
        %699 = vmatpush1.bf16.msra.mxu0 0
        %700 = vmatprep.subr.bf16.mxu0 0
        %701 = vmatpush1.bf16.msra.mxu0 0
        %702 = vmatprep.subr.bf16.mxu0 0
        %703 = vmatpush1.bf16.msra.mxu0 0
        %704 = vmatprep.subr.bf16.mxu0 0
        %705 = vmatpush1.bf16.msra.mxu0 0
        %706 = vmatprep.subr.bf16.mxu0 0
        %707 = vmatpush1.bf16.msra.mxu0 0
        %708 = vmatprep.subr.bf16.mxu0 0
        %709 = vmatpush1.bf16.msra.mxu0 0
        %710 = vmatprep.subr.bf16.mxu0 0
        %711 = vmatpush1.bf16.msra.mxu0 0
        %712 = vmatprep.subr.bf16.mxu0 0
        %713 = vmatpush1.bf16.msra.mxu0 0
        %714 = vmatprep.subr.bf16.mxu0 0
        %715 = vmatpush1.bf16.msra.mxu0 0
        %716 = vmatprep.subr.bf16.mxu0 0
        %717 = vmatpush1.bf16.msra.mxu0 0
        %718 = vmatprep.mubr.bf16.mxu0 0
        %719 = vmatmul.mubr.bf16.gmra.mrb[0].mxu0 %v681
        %v720 = vpop.f32.mrb[0].mxu0
        %v721 = vadd.f32 0.0, %v720
        %v722 = vpop.f32.mrb[0].mxu0
        %v723 = vpop.f32.mrb[0].mxu0
        %v724 = vpop.f32.mrb[0].mxu0
        %725 = vdwg.mxu0
        %v726 = vadd.f32 %v675, %v721
        %s727 = scalar_lea.vmem %s356, 14
        %v728 = vld [vmem:[%s727] sm:$0x3]
        %729 = vrot.lane.b32.xlu0 %v375, 107
        %v730 = vpop.permute.xlu0 %729
        %v732 = vsel %vm378, %v728, 0
        %v735 = vsel %vm382, %v730, 0
        %737 = vmatprep.subr.bf16.mxu0 0
        %738 = vmatpush1.bf16.msra.mxu0 %v735
        %739 = vmatprep.subr.bf16.mxu0 0
        %740 = vmatpush1.bf16.msra.mxu0 0
        %741 = vmatprep.subr.bf16.mxu0 0
        %742 = vmatpush1.bf16.msra.mxu0 0
        %743 = vmatprep.subr.bf16.mxu0 0
        %744 = vmatpush1.bf16.msra.mxu0 0
        %745 = vmatprep.subr.bf16.mxu0 0
        %746 = vmatpush1.bf16.msra.mxu0 0
        %747 = vmatprep.subr.bf16.mxu0 0
        %748 = vmatpush1.bf16.msra.mxu0 0
        %749 = vmatprep.subr.bf16.mxu0 0
        %750 = vmatpush1.bf16.msra.mxu0 0
        %751 = vmatprep.subr.bf16.mxu0 0
        %752 = vmatpush1.bf16.msra.mxu0 0
        %753 = vmatprep.subr.bf16.mxu0 0
        %754 = vmatpush1.bf16.msra.mxu0 0
        %755 = vmatprep.subr.bf16.mxu0 0
        %756 = vmatpush1.bf16.msra.mxu0 0
        %757 = vmatprep.subr.bf16.mxu0 0
        %758 = vmatpush1.bf16.msra.mxu0 0
        %759 = vmatprep.subr.bf16.mxu0 0
        %760 = vmatpush1.bf16.msra.mxu0 0
        %761 = vmatprep.subr.bf16.mxu0 0
        %762 = vmatpush1.bf16.msra.mxu0 0
        %763 = vmatprep.subr.bf16.mxu0 0
        %764 = vmatpush1.bf16.msra.mxu0 0
        %765 = vmatprep.subr.bf16.mxu0 0
        %766 = vmatpush1.bf16.msra.mxu0 0
        %767 = vmatprep.subr.bf16.mxu0 0
        %768 = vmatpush1.bf16.msra.mxu0 0
        %769 = vmatprep.mubr.bf16.mxu0 0
        %770 = vmatmul.mubr.bf16.gmra.mrb[0].mxu0 %v732
        %v771 = vpop.f32.mrb[0].mxu0
        %v772 = vadd.f32 0.0, %v771
        %v773 = vpop.f32.mrb[0].mxu0
        %v774 = vpop.f32.mrb[0].mxu0
        %v775 = vpop.f32.mrb[0].mxu0
        %776 = vdwg.mxu0
        %v777 = vadd.f32 %v726, %v772
        %s778 = scalar_lea.vmem %s356, 16
        %v779 = vld [vmem:[%s778] sm:$0x3]
        %780 = vrot.lane.b32.xlu0 %v375, 106
        %v781 = vpop.permute.xlu0 %780
        %v783 = vsel %vm378, %v779, 0
        %v786 = vsel %vm382, %v781, 0
        %788 = vmatprep.subr.bf16.mxu0 0
        %789 = vmatpush1.bf16.msra.mxu0 %v786
        %790 = vmatprep.subr.bf16.mxu0 0
        %791 = vmatpush1.bf16.msra.mxu0 0
        %792 = vmatprep.subr.bf16.mxu0 0
        %793 = vmatpush1.bf16.msra.mxu0 0
        %794 = vmatprep.subr.bf16.mxu0 0
        %795 = vmatpush1.bf16.msra.mxu0 0
        %796 = vmatprep.subr.bf16.mxu0 0
        %797 = vmatpush1.bf16.msra.mxu0 0
        %798 = vmatprep.subr.bf16.mxu0 0
        %799 = vmatpush1.bf16.msra.mxu0 0
        %800 = vmatprep.subr.bf16.mxu0 0
        %801 = vmatpush1.bf16.msra.mxu0 0
        %802 = vmatprep.subr.bf16.mxu0 0
        %803 = vmatpush1.bf16.msra.mxu0 0
        %804 = vmatprep.subr.bf16.mxu0 0
        %805 = vmatpush1.bf16.msra.mxu0 0
        %806 = vmatprep.subr.bf16.mxu0 0
        %807 = vmatpush1.bf16.msra.mxu0 0
        %808 = vmatprep.subr.bf16.mxu0 0
        %809 = vmatpush1.bf16.msra.mxu0 0
        %810 = vmatprep.subr.bf16.mxu0 0
        %811 = vmatpush1.bf16.msra.mxu0 0
        %812 = vmatprep.subr.bf16.mxu0 0
        %813 = vmatpush1.bf16.msra.mxu0 0
        %814 = vmatprep.subr.bf16.mxu0 0
        %815 = vmatpush1.bf16.msra.mxu0 0
        %816 = vmatprep.subr.bf16.mxu0 0
        %817 = vmatpush1.bf16.msra.mxu0 0
        %818 = vmatprep.subr.bf16.mxu0 0
        %819 = vmatpush1.bf16.msra.mxu0 0
        %820 = vmatprep.mubr.bf16.mxu0 0
        %821 = vmatmul.mubr.bf16.gmra.mrb[0].mxu0 %v783
        %v822 = vpop.f32.mrb[0].mxu0
        %v823 = vadd.f32 0.0, %v822
        %v824 = vpop.f32.mrb[0].mxu0
        %v825 = vpop.f32.mrb[0].mxu0
        %v826 = vpop.f32.mrb[0].mxu0
        %827 = vdwg.mxu0
        %v828 = vadd.f32 %v777, %v823
        %s829 = scalar_lea.vmem %s356, 18
        %v830 = vld [vmem:[%s829] sm:$0x3]
        %v832 = vsel %vm378, %v830, 0
        %v835 = vsel %vm382, %v363, 0
        %837 = vmatprep.subr.bf16.mxu0 0
        %838 = vmatpush1.bf16.msra.mxu0 %v835
        %839 = vmatprep.subr.bf16.mxu0 0
        %840 = vmatpush1.bf16.msra.mxu0 0
        %841 = vmatprep.subr.bf16.mxu0 0
        %842 = vmatpush1.bf16.msra.mxu0 0
        %843 = vmatprep.subr.bf16.mxu0 0
        %844 = vmatpush1.bf16.msra.mxu0 0
        %845 = vmatprep.subr.bf16.mxu0 0
        %846 = vmatpush1.bf16.msra.mxu0 0
        %847 = vmatprep.subr.bf16.mxu0 0
        %848 = vmatpush1.bf16.msra.mxu0 0
        %849 = vmatprep.subr.bf16.mxu0 0
        %850 = vmatpush1.bf16.msra.mxu0 0
        %851 = vmatprep.subr.bf16.mxu0 0
        %852 = vmatpush1.bf16.msra.mxu0 0
        %853 = vmatprep.subr.bf16.mxu0 0
        %854 = vmatpush1.bf16.msra.mxu0 0
        %855 = vmatprep.subr.bf16.mxu0 0
        %856 = vmatpush1.bf16.msra.mxu0 0
        %857 = vmatprep.subr.bf16.mxu0 0
        %858 = vmatpush1.bf16.msra.mxu0 0
        %859 = vmatprep.subr.bf16.mxu0 0
        %860 = vmatpush1.bf16.msra.mxu0 0
        %861 = vmatprep.subr.bf16.mxu0 0
        %862 = vmatpush1.bf16.msra.mxu0 0
        %863 = vmatprep.subr.bf16.mxu0 0
        %864 = vmatpush1.bf16.msra.mxu0 0
        %865 = vmatprep.subr.bf16.mxu0 0
        %866 = vmatpush1.bf16.msra.mxu0 0
        %867 = vmatprep.subr.bf16.mxu0 0
        %868 = vmatpush1.bf16.msra.mxu0 0
        %869 = vmatprep.mubr.bf16.mxu0 0
        %870 = vmatmul.mubr.bf16.gmra.mrb[0].mxu0 %v832
        %v871 = vpop.f32.mrb[0].mxu0
        %v872 = vadd.f32 0.0, %v871
        %v873 = vpop.f32.mrb[0].mxu0
        %v874 = vpop.f32.mrb[0].mxu0
        %v875 = vpop.f32.mrb[0].mxu0
        %876 = vdwg.mxu0
        %v877 = vadd.f32 %v828, %v872
        %s878 = scalar_lea.vmem %s356, 20
        %v879 = vld [vmem:[%s878] sm:$0x3]
        %v882 = vunpack.c.l.s4 1983009808
        %v883 = vunpack.c.0.s8 %v882
        %v884 = vlaneseq
        %v885 = vshrl.u32 %v884, 7
        %v886 = vsub.s32 %v883, %v885
        %v887 = vrot.slane %v363, %v886
        %888 = vrot.lane.b32.xlu0 %v887, 127
        %v889 = vpop.permute.xlu0 %888
        %v891 = vsel %vm378, %v879, 0
        %v894 = vsel %vm382, %v889, 0
        %896 = vmatprep.subr.bf16.mxu0 0
        %897 = vmatpush1.bf16.msra.mxu0 %v894
        %898 = vmatprep.subr.bf16.mxu0 0
        %899 = vmatpush1.bf16.msra.mxu0 0
        %900 = vmatprep.subr.bf16.mxu0 0
        %901 = vmatpush1.bf16.msra.mxu0 0
        %902 = vmatprep.subr.bf16.mxu0 0
        %903 = vmatpush1.bf16.msra.mxu0 0
        %904 = vmatprep.subr.bf16.mxu0 0
        %905 = vmatpush1.bf16.msra.mxu0 0
        %906 = vmatprep.subr.bf16.mxu0 0
        %907 = vmatpush1.bf16.msra.mxu0 0
        %908 = vmatprep.subr.bf16.mxu0 0
        %909 = vmatpush1.bf16.msra.mxu0 0
        %910 = vmatprep.subr.bf16.mxu0 0
        %911 = vmatpush1.bf16.msra.mxu0 0
        %912 = vmatprep.subr.bf16.mxu0 0
        %913 = vmatpush1.bf16.msra.mxu0 0
        %914 = vmatprep.subr.bf16.mxu0 0
        %915 = vmatpush1.bf16.msra.mxu0 0
        %916 = vmatprep.subr.bf16.mxu0 0
        %917 = vmatpush1.bf16.msra.mxu0 0
        %918 = vmatprep.subr.bf16.mxu0 0
        %919 = vmatpush1.bf16.msra.mxu0 0
        %920 = vmatprep.subr.bf16.mxu0 0
        %921 = vmatpush1.bf16.msra.mxu0 0
        %922 = vmatprep.subr.bf16.mxu0 0
        %923 = vmatpush1.bf16.msra.mxu0 0
        %924 = vmatprep.subr.bf16.mxu0 0
        %925 = vmatpush1.bf16.msra.mxu0 0
        %926 = vmatprep.subr.bf16.mxu0 0
        %927 = vmatpush1.bf16.msra.mxu0 0
        %928 = vmatprep.mubr.bf16.mxu0 0
        %929 = vmatmul.mubr.bf16.gmra.mrb[0].mxu0 %v891
        %v930 = vpop.f32.mrb[0].mxu0
        %v931 = vadd.f32 0.0, %v930
        %v932 = vpop.f32.mrb[0].mxu0
        %v933 = vpop.f32.mrb[0].mxu0
        %v934 = vpop.f32.mrb[0].mxu0
        %935 = vdwg.mxu0
        %v936 = vadd.f32 %v877, %v931
        %s937 = scalar_lea.vmem %s356, 22
        %v938 = vld [vmem:[%s937] sm:$0x3]
        %939 = vrot.lane.b32.xlu0 %v887, 126
        %v940 = vpop.permute.xlu0 %939
        %v942 = vsel %vm378, %v938, 0
        %v945 = vsel %vm382, %v940, 0
        %947 = vmatprep.subr.bf16.mxu0 0
        %948 = vmatpush1.bf16.msra.mxu0 %v945
        %949 = vmatprep.subr.bf16.mxu0 0
        %950 = vmatpush1.bf16.msra.mxu0 0
        %951 = vmatprep.subr.bf16.mxu0 0
        %952 = vmatpush1.bf16.msra.mxu0 0
        %953 = vmatprep.subr.bf16.mxu0 0
        %954 = vmatpush1.bf16.msra.mxu0 0
        %955 = vmatprep.subr.bf16.mxu0 0
        %956 = vmatpush1.bf16.msra.mxu0 0
        %957 = vmatprep.subr.bf16.mxu0 0
        %958 = vmatpush1.bf16.msra.mxu0 0
        %959 = vmatprep.subr.bf16.mxu0 0
        %960 = vmatpush1.bf16.msra.mxu0 0
        %961 = vmatprep.subr.bf16.mxu0 0
        %962 = vmatpush1.bf16.msra.mxu0 0
        %963 = vmatprep.subr.bf16.mxu0 0
        %964 = vmatpush1.bf16.msra.mxu0 0
        %965 = vmatprep.subr.bf16.mxu0 0
        %966 = vmatpush1.bf16.msra.mxu0 0
        %967 = vmatprep.subr.bf16.mxu0 0
        %968 = vmatpush1.bf16.msra.mxu0 0
        %969 = vmatprep.subr.bf16.mxu0 0
        %970 = vmatpush1.bf16.msra.mxu0 0
        %971 = vmatprep.subr.bf16.mxu0 0
        %972 = vmatpush1.bf16.msra.mxu0 0
        %973 = vmatprep.subr.bf16.mxu0 0
        %974 = vmatpush1.bf16.msra.mxu0 0
        %975 = vmatprep.subr.bf16.mxu0 0
        %976 = vmatpush1.bf16.msra.mxu0 0
        %977 = vmatprep.subr.bf16.mxu0 0
        %978 = vmatpush1.bf16.msra.mxu0 0
        %979 = vmatprep.mubr.bf16.mxu0 0
        %980 = vmatmul.mubr.bf16.gmra.mrb[0].mxu0 %v942
        %v981 = vpop.f32.mrb[0].mxu0
        %v982 = vadd.f32 0.0, %v981
        %v983 = vpop.f32.mrb[0].mxu0
        %v984 = vpop.f32.mrb[0].mxu0
        %v985 = vpop.f32.mrb[0].mxu0
        %986 = vdwg.mxu0
        %v987 = vadd.f32 %v936, %v982
        %s988 = scalar_lea.vmem %s356, 24
        %v989 = vld [vmem:[%s988] sm:$0x3]
        %990 = vrot.lane.b32.xlu0 %v887, 118
        %v991 = vpop.permute.xlu0 %990
        %v993 = vsel %vm378, %v989, 0
        %v996 = vsel %vm382, %v991, 0
        %998 = vmatprep.subr.bf16.mxu0 0
        %999 = vmatpush1.bf16.msra.mxu0 %v996
        %1000 = vmatprep.subr.bf16.mxu0 0
        %1001 = vmatpush1.bf16.msra.mxu0 0
        %1002 = vmatprep.subr.bf16.mxu0 0
        %1003 = vmatpush1.bf16.msra.mxu0 0
        %1004 = vmatprep.subr.bf16.mxu0 0
        %1005 = vmatpush1.bf16.msra.mxu0 0
        %1006 = vmatprep.subr.bf16.mxu0 0
        %1007 = vmatpush1.bf16.msra.mxu0 0
        %1008 = vmatprep.subr.bf16.mxu0 0
        %1009 = vmatpush1.bf16.msra.mxu0 0
        %1010 = vmatprep.subr.bf16.mxu0 0
        %1011 = vmatpush1.bf16.msra.mxu0 0
        %1012 = vmatprep.subr.bf16.mxu0 0
        %1013 = vmatpush1.bf16.msra.mxu0 0
        %1014 = vmatprep.subr.bf16.mxu0 0
        %1015 = vmatpush1.bf16.msra.mxu0 0
        %1016 = vmatprep.subr.bf16.mxu0 0
        %1017 = vmatpush1.bf16.msra.mxu0 0
        %1018 = vmatprep.subr.bf16.mxu0 0
        %1019 = vmatpush1.bf16.msra.mxu0 0
        %1020 = vmatprep.subr.bf16.mxu0 0
        %1021 = vmatpush1.bf16.msra.mxu0 0
        %1022 = vmatprep.subr.bf16.mxu0 0
        %1023 = vmatpush1.bf16.msra.mxu0 0
        %1024 = vmatprep.subr.bf16.mxu0 0
        %1025 = vmatpush1.bf16.msra.mxu0 0
        %1026 = vmatprep.subr.bf16.mxu0 0
        %1027 = vmatpush1.bf16.msra.mxu0 0
        %1028 = vmatprep.subr.bf16.mxu0 0
        %1029 = vmatpush1.bf16.msra.mxu0 0
        %1030 = vmatprep.mubr.bf16.mxu0 0
        %1031 = vmatmul.mubr.bf16.gmra.mrb[0].mxu0 %v993
        %v1032 = vpop.f32.mrb[0].mxu0
        %v1033 = vadd.f32 0.0, %v1032
        %v1034 = vpop.f32.mrb[0].mxu0
        %v1035 = vpop.f32.mrb[0].mxu0
        %v1036 = vpop.f32.mrb[0].mxu0
        %1037 = vdwg.mxu0
        %v1038 = vadd.f32 %v987, %v1033
        %s1039 = scalar_lea.vmem %s356, 26
        %v1040 = vld [vmem:[%s1039] sm:$0x3]
        %1041 = vrot.lane.b32.xlu0 %v887, 117
        %v1042 = vpop.permute.xlu0 %1041
        %v1044 = vsel %vm378, %v1040, 0
        %v1047 = vsel %vm382, %v1042, 0
        %1049 = vmatprep.subr.bf16.mxu0 0
        %1050 = vmatpush1.bf16.msra.mxu0 %v1047
        %1051 = vmatprep.subr.bf16.mxu0 0
        %1052 = vmatpush1.bf16.msra.mxu0 0
        %1053 = vmatprep.subr.bf16.mxu0 0
        %1054 = vmatpush1.bf16.msra.mxu0 0
        %1055 = vmatprep.subr.bf16.mxu0 0
        %1056 = vmatpush1.bf16.msra.mxu0 0
        %1057 = vmatprep.subr.bf16.mxu0 0
        %1058 = vmatpush1.bf16.msra.mxu0 0
        %1059 = vmatprep.subr.bf16.mxu0 0
        %1060 = vmatpush1.bf16.msra.mxu0 0
        %1061 = vmatprep.subr.bf16.mxu0 0
        %1062 = vmatpush1.bf16.msra.mxu0 0
        %1063 = vmatprep.subr.bf16.mxu0 0
        %1064 = vmatpush1.bf16.msra.mxu0 0
        %1065 = vmatprep.subr.bf16.mxu0 0
        %1066 = vmatpush1.bf16.msra.mxu0 0
        %1067 = vmatprep.subr.bf16.mxu0 0
        %1068 = vmatpush1.bf16.msra.mxu0 0
        %1069 = vmatprep.subr.bf16.mxu0 0
        %1070 = vmatpush1.bf16.msra.mxu0 0
        %1071 = vmatprep.subr.bf16.mxu0 0
        %1072 = vmatpush1.bf16.msra.mxu0 0
        %1073 = vmatprep.subr.bf16.mxu0 0
        %1074 = vmatpush1.bf16.msra.mxu0 0
        %1075 = vmatprep.subr.bf16.mxu0 0
        %1076 = vmatpush1.bf16.msra.mxu0 0
        %1077 = vmatprep.subr.bf16.mxu0 0
        %1078 = vmatpush1.bf16.msra.mxu0 0
        %1079 = vmatprep.subr.bf16.mxu0 0
        %1080 = vmatpush1.bf16.msra.mxu0 0
        %1081 = vmatprep.mubr.bf16.mxu0 0
        %1082 = vmatmul.mubr.bf16.gmra.mrb[0].mxu0 %v1044
        %v1083 = vpop.f32.mrb[0].mxu0
        %v1084 = vadd.f32 0.0, %v1083
        %v1085 = vpop.f32.mrb[0].mxu0
        %v1086 = vpop.f32.mrb[0].mxu0
        %v1087 = vpop.f32.mrb[0].mxu0
        %1088 = vdwg.mxu0
        %v1089 = vadd.f32 %v1038, %v1084
        %s1090 = scalar_lea.vmem %s356, 28
        %v1091 = vld [vmem:[%s1090] sm:$0x3]
        %1092 = vrot.lane.b32.xlu0 %v887, 116
        %v1093 = vpop.permute.xlu0 %1092
        %v1095 = vsel %vm378, %v1091, 0
        %v1098 = vsel %vm382, %v1093, 0
        %1100 = vmatprep.subr.bf16.mxu0 0
        %1101 = vmatpush1.bf16.msra.mxu0 %v1098
        %1102 = vmatprep.subr.bf16.mxu0 0
        %1103 = vmatpush1.bf16.msra.mxu0 0
        %1104 = vmatprep.subr.bf16.mxu0 0
        %1105 = vmatpush1.bf16.msra.mxu0 0
        %1106 = vmatprep.subr.bf16.mxu0 0
        %1107 = vmatpush1.bf16.msra.mxu0 0
        %1108 = vmatprep.subr.bf16.mxu0 0
        %1109 = vmatpush1.bf16.msra.mxu0 0
        %1110 = vmatprep.subr.bf16.mxu0 0
        %1111 = vmatpush1.bf16.msra.mxu0 0
        %1112 = vmatprep.subr.bf16.mxu0 0
        %1113 = vmatpush1.bf16.msra.mxu0 0
        %1114 = vmatprep.subr.bf16.mxu0 0
        %1115 = vmatpush1.bf16.msra.mxu0 0
        %1116 = vmatprep.subr.bf16.mxu0 0
        %1117 = vmatpush1.bf16.msra.mxu0 0
        %1118 = vmatprep.subr.bf16.mxu0 0
        %1119 = vmatpush1.bf16.msra.mxu0 0
        %1120 = vmatprep.subr.bf16.mxu0 0
        %1121 = vmatpush1.bf16.msra.mxu0 0
        %1122 = vmatprep.subr.bf16.mxu0 0
        %1123 = vmatpush1.bf16.msra.mxu0 0
        %1124 = vmatprep.subr.bf16.mxu0 0
        %1125 = vmatpush1.bf16.msra.mxu0 0
        %1126 = vmatprep.subr.bf16.mxu0 0
        %1127 = vmatpush1.bf16.msra.mxu0 0
        %1128 = vmatprep.subr.bf16.mxu0 0
        %1129 = vmatpush1.bf16.msra.mxu0 0
        %1130 = vmatprep.subr.bf16.mxu0 0
        %1131 = vmatpush1.bf16.msra.mxu0 0
        %1132 = vmatprep.mubr.bf16.mxu0 0
        %1133 = vmatmul.mubr.bf16.gmra.mrb[0].mxu0 %v1095
        %v1134 = vpop.f32.mrb[0].mxu0
        %v1135 = vadd.f32 0.0, %v1134
        %v1136 = vpop.f32.mrb[0].mxu0
        %v1137 = vpop.f32.mrb[0].mxu0
        %v1138 = vpop.f32.mrb[0].mxu0
        %1139 = vdwg.mxu0
        %v1140 = vadd.f32 %v1089, %v1135
        %s1141 = scalar_lea.vmem %s356, 30
        %v1142 = vld [vmem:[%s1141] sm:$0x3]
        %1143 = vrot.lane.b32.xlu0 %v887, 108
        %v1144 = vpop.permute.xlu0 %1143
        %v1146 = vsel %vm378, %v1142, 0
        %v1149 = vsel %vm382, %v1144, 0
        %1151 = vmatprep.subr.bf16.mxu0 0
        %1152 = vmatpush1.bf16.msra.mxu0 %v1149
        %1153 = vmatprep.subr.bf16.mxu0 0
        %1154 = vmatpush1.bf16.msra.mxu0 0
        %1155 = vmatprep.subr.bf16.mxu0 0
        %1156 = vmatpush1.bf16.msra.mxu0 0
        %1157 = vmatprep.subr.bf16.mxu0 0
        %1158 = vmatpush1.bf16.msra.mxu0 0
        %1159 = vmatprep.subr.bf16.mxu0 0
        %1160 = vmatpush1.bf16.msra.mxu0 0
        %1161 = vmatprep.subr.bf16.mxu0 0
        %1162 = vmatpush1.bf16.msra.mxu0 0
        %1163 = vmatprep.subr.bf16.mxu0 0
        %1164 = vmatpush1.bf16.msra.mxu0 0
        %1165 = vmatprep.subr.bf16.mxu0 0
        %1166 = vmatpush1.bf16.msra.mxu0 0
        %1167 = vmatprep.subr.bf16.mxu0 0
        %1168 = vmatpush1.bf16.msra.mxu0 0
        %1169 = vmatprep.subr.bf16.mxu0 0
        %1170 = vmatpush1.bf16.msra.mxu0 0
        %1171 = vmatprep.subr.bf16.mxu0 0
        %1172 = vmatpush1.bf16.msra.mxu0 0
        %1173 = vmatprep.subr.bf16.mxu0 0
        %1174 = vmatpush1.bf16.msra.mxu0 0
        %1175 = vmatprep.subr.bf16.mxu0 0
        %1176 = vmatpush1.bf16.msra.mxu0 0
        %1177 = vmatprep.subr.bf16.mxu0 0
        %1178 = vmatpush1.bf16.msra.mxu0 0
        %1179 = vmatprep.subr.bf16.mxu0 0
        %1180 = vmatpush1.bf16.msra.mxu0 0
        %1181 = vmatprep.subr.bf16.mxu0 0
        %1182 = vmatpush1.bf16.msra.mxu0 0
        %1183 = vmatprep.mubr.bf16.mxu0 0
        %1184 = vmatmul.mubr.bf16.gmra.mrb[0].mxu0 %v1146
        %v1185 = vpop.f32.mrb[0].mxu0
        %v1186 = vadd.f32 0.0, %v1185
        %v1187 = vpop.f32.mrb[0].mxu0
        %v1188 = vpop.f32.mrb[0].mxu0
        %v1189 = vpop.f32.mrb[0].mxu0
        %1190 = vdwg.mxu0
        %v1191 = vadd.f32 %v1140, %v1186
        %s1192 = scalar_lea.vmem %s356, 32
        %v1193 = vld [vmem:[%s1192] sm:$0x3]
        %1194 = vrot.lane.b32.xlu0 %v887, 107
        %v1195 = vpop.permute.xlu0 %1194
        %v1197 = vsel %vm378, %v1193, 0
        %v1200 = vsel %vm382, %v1195, 0
        %1202 = vmatprep.subr.bf16.mxu0 0
        %1203 = vmatpush1.bf16.msra.mxu0 %v1200
        %1204 = vmatprep.subr.bf16.mxu0 0
        %1205 = vmatpush1.bf16.msra.mxu0 0
        %1206 = vmatprep.subr.bf16.mxu0 0
        %1207 = vmatpush1.bf16.msra.mxu0 0
        %1208 = vmatprep.subr.bf16.mxu0 0
        %1209 = vmatpush1.bf16.msra.mxu0 0
        %1210 = vmatprep.subr.bf16.mxu0 0
        %1211 = vmatpush1.bf16.msra.mxu0 0
        %1212 = vmatprep.subr.bf16.mxu0 0
        %1213 = vmatpush1.bf16.msra.mxu0 0
        %1214 = vmatprep.subr.bf16.mxu0 0
        %1215 = vmatpush1.bf16.msra.mxu0 0
        %1216 = vmatprep.subr.bf16.mxu0 0
        %1217 = vmatpush1.bf16.msra.mxu0 0
        %1218 = vmatprep.subr.bf16.mxu0 0
        %1219 = vmatpush1.bf16.msra.mxu0 0
        %1220 = vmatprep.subr.bf16.mxu0 0
        %1221 = vmatpush1.bf16.msra.mxu0 0
        %1222 = vmatprep.subr.bf16.mxu0 0
        %1223 = vmatpush1.bf16.msra.mxu0 0
        %1224 = vmatprep.subr.bf16.mxu0 0
        %1225 = vmatpush1.bf16.msra.mxu0 0
        %1226 = vmatprep.subr.bf16.mxu0 0
        %1227 = vmatpush1.bf16.msra.mxu0 0
        %1228 = vmatprep.subr.bf16.mxu0 0
        %1229 = vmatpush1.bf16.msra.mxu0 0
        %1230 = vmatprep.subr.bf16.mxu0 0
        %1231 = vmatpush1.bf16.msra.mxu0 0
        %1232 = vmatprep.subr.bf16.mxu0 0
        %1233 = vmatpush1.bf16.msra.mxu0 0
        %1234 = vmatprep.mubr.bf16.mxu0 0
        %1235 = vmatmul.mubr.bf16.gmra.mrb[0].mxu0 %v1197
        %v1236 = vpop.f32.mrb[0].mxu0
        %v1237 = vadd.f32 0.0, %v1236
        %v1238 = vpop.f32.mrb[0].mxu0
        %v1239 = vpop.f32.mrb[0].mxu0
        %v1240 = vpop.f32.mrb[0].mxu0
        %1241 = vdwg.mxu0
        %v1242 = vadd.f32 %v1191, %v1237
        %s1243 = scalar_lea.vmem %s356, 34
        %v1244 = vld [vmem:[%s1243] sm:$0x3]
        %1245 = vrot.lane.b32.xlu0 %v887, 106
        %v1246 = vpop.permute.xlu0 %1245
        %v1248 = vsel %vm378, %v1244, 0
        %v1251 = vsel %vm382, %v1246, 0
        %1253 = vmatprep.subr.bf16.mxu0 0
        %1254 = vmatpush1.bf16.msra.mxu0 %v1251
        %1255 = vmatprep.subr.bf16.mxu0 0
        %1256 = vmatpush1.bf16.msra.mxu0 0
        %1257 = vmatprep.subr.bf16.mxu0 0
        %1258 = vmatpush1.bf16.msra.mxu0 0
        %1259 = vmatprep.subr.bf16.mxu0 0
        %1260 = vmatpush1.bf16.msra.mxu0 0
        %1261 = vmatprep.subr.bf16.mxu0 0
        %1262 = vmatpush1.bf16.msra.mxu0 0
        %1263 = vmatprep.subr.bf16.mxu0 0
        %1264 = vmatpush1.bf16.msra.mxu0 0
        %1265 = vmatprep.subr.bf16.mxu0 0
        %1266 = vmatpush1.bf16.msra.mxu0 0
        %1267 = vmatprep.subr.bf16.mxu0 0
        %1268 = vmatpush1.bf16.msra.mxu0 0
        %1269 = vmatprep.subr.bf16.mxu0 0
        %1270 = vmatpush1.bf16.msra.mxu0 0
        %1271 = vmatprep.subr.bf16.mxu0 0
        %1272 = vmatpush1.bf16.msra.mxu0 0
        %1273 = vmatprep.subr.bf16.mxu0 0
        %1274 = vmatpush1.bf16.msra.mxu0 0
        %1275 = vmatprep.subr.bf16.mxu0 0
        %1276 = vmatpush1.bf16.msra.mxu0 0
        %1277 = vmatprep.subr.bf16.mxu0 0
        %1278 = vmatpush1.bf16.msra.mxu0 0
        %1279 = vmatprep.subr.bf16.mxu0 0
        %1280 = vmatpush1.bf16.msra.mxu0 0
        %1281 = vmatprep.subr.bf16.mxu0 0
        %1282 = vmatpush1.bf16.msra.mxu0 0
        %1283 = vmatprep.subr.bf16.mxu0 0
        %1284 = vmatpush1.bf16.msra.mxu0 0
        %1285 = vmatprep.mubr.bf16.mxu0 0
        %1286 = vmatmul.mubr.bf16.gmra.mrb[0].mxu0 %v1248
        %v1287 = vpop.f32.mrb[0].mxu0
        %v1288 = vadd.f32 0.0, %v1287
        %v1289 = vpop.f32.mrb[0].mxu0
        %v1290 = vpop.f32.mrb[0].mxu0
        %v1291 = vpop.f32.mrb[0].mxu0
        %1292 = vdwg.mxu0
        %v1293 = vadd.f32 %v1242, %v1288
        %s1294 = scalar_lea.vmem %s356, 36
        %v1295 = vld [vmem:[%s1294] sm:$0x3]
        %v1297 = vsel %vm378, %v1295, 0
        %v1300 = vsel %vm382, %v364, 0
        %1302 = vmatprep.subr.bf16.mxu0 0
        %1303 = vmatpush1.bf16.msra.mxu0 %v1300
        %1304 = vmatprep.subr.bf16.mxu0 0
        %1305 = vmatpush1.bf16.msra.mxu0 0
        %1306 = vmatprep.subr.bf16.mxu0 0
        %1307 = vmatpush1.bf16.msra.mxu0 0
        %1308 = vmatprep.subr.bf16.mxu0 0
        %1309 = vmatpush1.bf16.msra.mxu0 0
        %1310 = vmatprep.subr.bf16.mxu0 0
        %1311 = vmatpush1.bf16.msra.mxu0 0
        %1312 = vmatprep.subr.bf16.mxu0 0
        %1313 = vmatpush1.bf16.msra.mxu0 0
        %1314 = vmatprep.subr.bf16.mxu0 0
        %1315 = vmatpush1.bf16.msra.mxu0 0
        %1316 = vmatprep.subr.bf16.mxu0 0
        %1317 = vmatpush1.bf16.msra.mxu0 0
        %1318 = vmatprep.subr.bf16.mxu0 0
        %1319 = vmatpush1.bf16.msra.mxu0 0
        %1320 = vmatprep.subr.bf16.mxu0 0
        %1321 = vmatpush1.bf16.msra.mxu0 0
        %1322 = vmatprep.subr.bf16.mxu0 0
        %1323 = vmatpush1.bf16.msra.mxu0 0
        %1324 = vmatprep.subr.bf16.mxu0 0
        %1325 = vmatpush1.bf16.msra.mxu0 0
        %1326 = vmatprep.subr.bf16.mxu0 0
        %1327 = vmatpush1.bf16.msra.mxu0 0
        %1328 = vmatprep.subr.bf16.mxu0 0
        %1329 = vmatpush1.bf16.msra.mxu0 0
        %1330 = vmatprep.subr.bf16.mxu0 0
        %1331 = vmatpush1.bf16.msra.mxu0 0
        %1332 = vmatprep.subr.bf16.mxu0 0
        %1333 = vmatpush1.bf16.msra.mxu0 0
        %1334 = vmatprep.mubr.bf16.mxu0 0
        %1335 = vmatmul.mubr.bf16.gmra.mrb[0].mxu0 %v1297
        %v1336 = vpop.f32.mrb[0].mxu0
        %v1337 = vadd.f32 0.0, %v1336
        %v1338 = vpop.f32.mrb[0].mxu0
        %v1339 = vpop.f32.mrb[0].mxu0
        %v1340 = vpop.f32.mrb[0].mxu0
        %1341 = vdwg.mxu0
        %v1342 = vadd.f32 %v1293, %v1337
        %s1343 = scalar_lea.vmem %s356, 38
        %v1344 = vld [vmem:[%s1343] sm:$0x3]
        %v1347 = vunpack.c.l.s4 1983009808
        %v1348 = vunpack.c.0.s8 %v1347
        %v1349 = vlaneseq
        %v1350 = vshrl.u32 %v1349, 7
        %v1351 = vsub.s32 %v1348, %v1350
        %v1352 = vrot.slane %v364, %v1351
        %1353 = vrot.lane.b32.xlu0 %v1352, 127
        %v1354 = vpop.permute.xlu0 %1353
        %v1356 = vsel %vm378, %v1344, 0
        %v1359 = vsel %vm382, %v1354, 0
        %1361 = vmatprep.subr.bf16.mxu0 0
        %1362 = vmatpush1.bf16.msra.mxu0 %v1359
        %1363 = vmatprep.subr.bf16.mxu0 0
        %1364 = vmatpush1.bf16.msra.mxu0 0
        %1365 = vmatprep.subr.bf16.mxu0 0
        %1366 = vmatpush1.bf16.msra.mxu0 0
        %1367 = vmatprep.subr.bf16.mxu0 0
        %1368 = vmatpush1.bf16.msra.mxu0 0
        %1369 = vmatprep.subr.bf16.mxu0 0
        %1370 = vmatpush1.bf16.msra.mxu0 0
        %1371 = vmatprep.subr.bf16.mxu0 0
        %1372 = vmatpush1.bf16.msra.mxu0 0
        %1373 = vmatprep.subr.bf16.mxu0 0
        %1374 = vmatpush1.bf16.msra.mxu0 0
        %1375 = vmatprep.subr.bf16.mxu0 0
        %1376 = vmatpush1.bf16.msra.mxu0 0
        %1377 = vmatprep.subr.bf16.mxu0 0
        %1378 = vmatpush1.bf16.msra.mxu0 0
        %1379 = vmatprep.subr.bf16.mxu0 0
        %1380 = vmatpush1.bf16.msra.mxu0 0
        %1381 = vmatprep.subr.bf16.mxu0 0
        %1382 = vmatpush1.bf16.msra.mxu0 0
        %1383 = vmatprep.subr.bf16.mxu0 0
        %1384 = vmatpush1.bf16.msra.mxu0 0
        %1385 = vmatprep.subr.bf16.mxu0 0
        %1386 = vmatpush1.bf16.msra.mxu0 0
        %1387 = vmatprep.subr.bf16.mxu0 0
        %1388 = vmatpush1.bf16.msra.mxu0 0
        %1389 = vmatprep.subr.bf16.mxu0 0
        %1390 = vmatpush1.bf16.msra.mxu0 0
        %1391 = vmatprep.subr.bf16.mxu0 0
        %1392 = vmatpush1.bf16.msra.mxu0 0
        %1393 = vmatprep.mubr.bf16.mxu0 0
        %1394 = vmatmul.mubr.bf16.gmra.mrb[0].mxu0 %v1356
        %v1395 = vpop.f32.mrb[0].mxu0
        %v1396 = vadd.f32 0.0, %v1395
        %v1397 = vpop.f32.mrb[0].mxu0
        %v1398 = vpop.f32.mrb[0].mxu0
        %v1399 = vpop.f32.mrb[0].mxu0
        %1400 = vdwg.mxu0
        %v1401 = vadd.f32 %v1342, %v1396
        %s1402 = scalar_lea.vmem %s356, 40
        %v1403 = vld [vmem:[%s1402] sm:$0x3]
        %1404 = vrot.lane.b32.xlu0 %v1352, 126
        %v1405 = vpop.permute.xlu0 %1404
        %v1407 = vsel %vm378, %v1403, 0
        %v1410 = vsel %vm382, %v1405, 0
        %1412 = vmatprep.subr.bf16.mxu0 0
        %1413 = vmatpush1.bf16.msra.mxu0 %v1410
        %1414 = vmatprep.subr.bf16.mxu0 0
        %1415 = vmatpush1.bf16.msra.mxu0 0
        %1416 = vmatprep.subr.bf16.mxu0 0
        %1417 = vmatpush1.bf16.msra.mxu0 0
        %1418 = vmatprep.subr.bf16.mxu0 0
        %1419 = vmatpush1.bf16.msra.mxu0 0
        %1420 = vmatprep.subr.bf16.mxu0 0
        %1421 = vmatpush1.bf16.msra.mxu0 0
        %1422 = vmatprep.subr.bf16.mxu0 0
        %1423 = vmatpush1.bf16.msra.mxu0 0
        %1424 = vmatprep.subr.bf16.mxu0 0
        %1425 = vmatpush1.bf16.msra.mxu0 0
        %1426 = vmatprep.subr.bf16.mxu0 0
        %1427 = vmatpush1.bf16.msra.mxu0 0
        %1428 = vmatprep.subr.bf16.mxu0 0
        %1429 = vmatpush1.bf16.msra.mxu0 0
        %1430 = vmatprep.subr.bf16.mxu0 0
        %1431 = vmatpush1.bf16.msra.mxu0 0
        %1432 = vmatprep.subr.bf16.mxu0 0
        %1433 = vmatpush1.bf16.msra.mxu0 0
        %1434 = vmatprep.subr.bf16.mxu0 0
        %1435 = vmatpush1.bf16.msra.mxu0 0
        %1436 = vmatprep.subr.bf16.mxu0 0
        %1437 = vmatpush1.bf16.msra.mxu0 0
        %1438 = vmatprep.subr.bf16.mxu0 0
        %1439 = vmatpush1.bf16.msra.mxu0 0
        %1440 = vmatprep.subr.bf16.mxu0 0
        %1441 = vmatpush1.bf16.msra.mxu0 0
        %1442 = vmatprep.subr.bf16.mxu0 0
        %1443 = vmatpush1.bf16.msra.mxu0 0
        %1444 = vmatprep.mubr.bf16.mxu0 0
        %1445 = vmatmul.mubr.bf16.gmra.mrb[0].mxu0 %v1407
        %v1446 = vpop.f32.mrb[0].mxu0
        %v1447 = vadd.f32 0.0, %v1446
        %v1448 = vpop.f32.mrb[0].mxu0
        %v1449 = vpop.f32.mrb[0].mxu0
        %v1450 = vpop.f32.mrb[0].mxu0
        %1451 = vdwg.mxu0
        %v1452 = vadd.f32 %v1401, %v1447
        %s1453 = scalar_lea.vmem %s356, 42
        %v1454 = vld [vmem:[%s1453] sm:$0x3]
        %1455 = vrot.lane.b32.xlu0 %v1352, 118
        %v1456 = vpop.permute.xlu0 %1455
        %v1458 = vsel %vm378, %v1454, 0
        %v1461 = vsel %vm382, %v1456, 0
        %1463 = vmatprep.subr.bf16.mxu0 0
        %1464 = vmatpush1.bf16.msra.mxu0 %v1461
        %1465 = vmatprep.subr.bf16.mxu0 0
        %1466 = vmatpush1.bf16.msra.mxu0 0
        %1467 = vmatprep.subr.bf16.mxu0 0
        %1468 = vmatpush1.bf16.msra.mxu0 0
        %1469 = vmatprep.subr.bf16.mxu0 0
        %1470 = vmatpush1.bf16.msra.mxu0 0
        %1471 = vmatprep.subr.bf16.mxu0 0
        %1472 = vmatpush1.bf16.msra.mxu0 0
        %1473 = vmatprep.subr.bf16.mxu0 0
        %1474 = vmatpush1.bf16.msra.mxu0 0
        %1475 = vmatprep.subr.bf16.mxu0 0
        %1476 = vmatpush1.bf16.msra.mxu0 0
        %1477 = vmatprep.subr.bf16.mxu0 0
        %1478 = vmatpush1.bf16.msra.mxu0 0
        %1479 = vmatprep.subr.bf16.mxu0 0
        %1480 = vmatpush1.bf16.msra.mxu0 0
        %1481 = vmatprep.subr.bf16.mxu0 0
        %1482 = vmatpush1.bf16.msra.mxu0 0
        %1483 = vmatprep.subr.bf16.mxu0 0
        %1484 = vmatpush1.bf16.msra.mxu0 0
        %1485 = vmatprep.subr.bf16.mxu0 0
        %1486 = vmatpush1.bf16.msra.mxu0 0
        %1487 = vmatprep.subr.bf16.mxu0 0
        %1488 = vmatpush1.bf16.msra.mxu0 0
        %1489 = vmatprep.subr.bf16.mxu0 0
        %1490 = vmatpush1.bf16.msra.mxu0 0
        %1491 = vmatprep.subr.bf16.mxu0 0
        %1492 = vmatpush1.bf16.msra.mxu0 0
        %1493 = vmatprep.subr.bf16.mxu0 0
        %1494 = vmatpush1.bf16.msra.mxu0 0
        %1495 = vmatprep.mubr.bf16.mxu0 0
        %1496 = vmatmul.mubr.bf16.gmra.mrb[0].mxu0 %v1458
        %v1497 = vpop.f32.mrb[0].mxu0
        %v1498 = vadd.f32 0.0, %v1497
        %v1499 = vpop.f32.mrb[0].mxu0
        %v1500 = vpop.f32.mrb[0].mxu0
        %v1501 = vpop.f32.mrb[0].mxu0
        %1502 = vdwg.mxu0
        %v1503 = vadd.f32 %v1452, %v1498
        %s1504 = scalar_lea.vmem %s356, 44
        %v1505 = vld [vmem:[%s1504] sm:$0x3]
        %1506 = vrot.lane.b32.xlu0 %v1352, 117
        %v1507 = vpop.permute.xlu0 %1506
        %v1509 = vsel %vm378, %v1505, 0
        %v1512 = vsel %vm382, %v1507, 0
        %1514 = vmatprep.subr.bf16.mxu0 0
        %1515 = vmatpush1.bf16.msra.mxu0 %v1512
        %1516 = vmatprep.subr.bf16.mxu0 0
        %1517 = vmatpush1.bf16.msra.mxu0 0
        %1518 = vmatprep.subr.bf16.mxu0 0
        %1519 = vmatpush1.bf16.msra.mxu0 0
        %1520 = vmatprep.subr.bf16.mxu0 0
        %1521 = vmatpush1.bf16.msra.mxu0 0
        %1522 = vmatprep.subr.bf16.mxu0 0
        %1523 = vmatpush1.bf16.msra.mxu0 0
        %1524 = vmatprep.subr.bf16.mxu0 0
        %1525 = vmatpush1.bf16.msra.mxu0 0
        %1526 = vmatprep.subr.bf16.mxu0 0
        %1527 = vmatpush1.bf16.msra.mxu0 0
        %1528 = vmatprep.subr.bf16.mxu0 0
        %1529 = vmatpush1.bf16.msra.mxu0 0
        %1530 = vmatprep.subr.bf16.mxu0 0
        %1531 = vmatpush1.bf16.msra.mxu0 0
        %1532 = vmatprep.subr.bf16.mxu0 0
        %1533 = vmatpush1.bf16.msra.mxu0 0
        %1534 = vmatprep.subr.bf16.mxu0 0
        %1535 = vmatpush1.bf16.msra.mxu0 0
        %1536 = vmatprep.subr.bf16.mxu0 0
        %1537 = vmatpush1.bf16.msra.mxu0 0
        %1538 = vmatprep.subr.bf16.mxu0 0
        %1539 = vmatpush1.bf16.msra.mxu0 0
        %1540 = vmatprep.subr.bf16.mxu0 0
        %1541 = vmatpush1.bf16.msra.mxu0 0
        %1542 = vmatprep.subr.bf16.mxu0 0
        %1543 = vmatpush1.bf16.msra.mxu0 0
        %1544 = vmatprep.subr.bf16.mxu0 0
        %1545 = vmatpush1.bf16.msra.mxu0 0
        %1546 = vmatprep.mubr.bf16.mxu0 0
        %1547 = vmatmul.mubr.bf16.gmra.mrb[0].mxu0 %v1509
        %v1548 = vpop.f32.mrb[0].mxu0
        %v1549 = vadd.f32 0.0, %v1548
        %v1550 = vpop.f32.mrb[0].mxu0
        %v1551 = vpop.f32.mrb[0].mxu0
        %v1552 = vpop.f32.mrb[0].mxu0
        %1553 = vdwg.mxu0
        %v1554 = vadd.f32 %v1503, %v1549
        %s1555 = scalar_lea.vmem %s356, 46
        %v1556 = vld [vmem:[%s1555] sm:$0x3]
        %1557 = vrot.lane.b32.xlu0 %v1352, 116
        %v1558 = vpop.permute.xlu0 %1557
        %v1560 = vsel %vm378, %v1556, 0
        %v1563 = vsel %vm382, %v1558, 0
        %1565 = vmatprep.subr.bf16.mxu0 0
        %1566 = vmatpush1.bf16.msra.mxu0 %v1563
        %1567 = vmatprep.subr.bf16.mxu0 0
        %1568 = vmatpush1.bf16.msra.mxu0 0
        %1569 = vmatprep.subr.bf16.mxu0 0
        %1570 = vmatpush1.bf16.msra.mxu0 0
        %1571 = vmatprep.subr.bf16.mxu0 0
        %1572 = vmatpush1.bf16.msra.mxu0 0
        %1573 = vmatprep.subr.bf16.mxu0 0
        %1574 = vmatpush1.bf16.msra.mxu0 0
        %1575 = vmatprep.subr.bf16.mxu0 0
        %1576 = vmatpush1.bf16.msra.mxu0 0
        %1577 = vmatprep.subr.bf16.mxu0 0
        %1578 = vmatpush1.bf16.msra.mxu0 0
        %1579 = vmatprep.subr.bf16.mxu0 0
        %1580 = vmatpush1.bf16.msra.mxu0 0
        %1581 = vmatprep.subr.bf16.mxu0 0
        %1582 = vmatpush1.bf16.msra.mxu0 0
        %1583 = vmatprep.subr.bf16.mxu0 0
        %1584 = vmatpush1.bf16.msra.mxu0 0
        %1585 = vmatprep.subr.bf16.mxu0 0
        %1586 = vmatpush1.bf16.msra.mxu0 0
        %1587 = vmatprep.subr.bf16.mxu0 0
        %1588 = vmatpush1.bf16.msra.mxu0 0
        %1589 = vmatprep.subr.bf16.mxu0 0
        %1590 = vmatpush1.bf16.msra.mxu0 0
        %1591 = vmatprep.subr.bf16.mxu0 0
        %1592 = vmatpush1.bf16.msra.mxu0 0
        %1593 = vmatprep.subr.bf16.mxu0 0
        %1594 = vmatpush1.bf16.msra.mxu0 0
        %1595 = vmatprep.subr.bf16.mxu0 0
        %1596 = vmatpush1.bf16.msra.mxu0 0
        %1597 = vmatprep.mubr.bf16.mxu0 0
        %1598 = vmatmul.mubr.bf16.gmra.mrb[0].mxu0 %v1560
        %v1599 = vpop.f32.mrb[0].mxu0
        %v1600 = vadd.f32 0.0, %v1599
        %v1601 = vpop.f32.mrb[0].mxu0
        %v1602 = vpop.f32.mrb[0].mxu0
        %v1603 = vpop.f32.mrb[0].mxu0
        %1604 = vdwg.mxu0
        %v1605 = vadd.f32 %v1554, %v1600
        %s1606 = scalar_lea.vmem %s356, 48
        %v1607 = vld [vmem:[%s1606] sm:$0x3]
        %1608 = vrot.lane.b32.xlu0 %v1352, 108
        %v1609 = vpop.permute.xlu0 %1608
        %v1611 = vsel %vm378, %v1607, 0
        %v1614 = vsel %vm382, %v1609, 0
        %1616 = vmatprep.subr.bf16.mxu0 0
        %1617 = vmatpush1.bf16.msra.mxu0 %v1614
        %1618 = vmatprep.subr.bf16.mxu0 0
        %1619 = vmatpush1.bf16.msra.mxu0 0
        %1620 = vmatprep.subr.bf16.mxu0 0
        %1621 = vmatpush1.bf16.msra.mxu0 0
        %1622 = vmatprep.subr.bf16.mxu0 0
        %1623 = vmatpush1.bf16.msra.mxu0 0
        %1624 = vmatprep.subr.bf16.mxu0 0
        %1625 = vmatpush1.bf16.msra.mxu0 0
        %1626 = vmatprep.subr.bf16.mxu0 0
        %1627 = vmatpush1.bf16.msra.mxu0 0
        %1628 = vmatprep.subr.bf16.mxu0 0
        %1629 = vmatpush1.bf16.msra.mxu0 0
        %1630 = vmatprep.subr.bf16.mxu0 0
        %1631 = vmatpush1.bf16.msra.mxu0 0
        %1632 = vmatprep.subr.bf16.mxu0 0
        %1633 = vmatpush1.bf16.msra.mxu0 0
        %1634 = vmatprep.subr.bf16.mxu0 0
        %1635 = vmatpush1.bf16.msra.mxu0 0
        %1636 = vmatprep.subr.bf16.mxu0 0
        %1637 = vmatpush1.bf16.msra.mxu0 0
        %1638 = vmatprep.subr.bf16.mxu0 0
        %1639 = vmatpush1.bf16.msra.mxu0 0
        %1640 = vmatprep.subr.bf16.mxu0 0
        %1641 = vmatpush1.bf16.msra.mxu0 0
        %1642 = vmatprep.subr.bf16.mxu0 0
        %1643 = vmatpush1.bf16.msra.mxu0 0
        %1644 = vmatprep.subr.bf16.mxu0 0
        %1645 = vmatpush1.bf16.msra.mxu0 0
        %1646 = vmatprep.subr.bf16.mxu0 0
        %1647 = vmatpush1.bf16.msra.mxu0 0
        %1648 = vmatprep.mubr.bf16.mxu0 0
        %1649 = vmatmul.mubr.bf16.gmra.mrb[0].mxu0 %v1611
        %v1650 = vpop.f32.mrb[0].mxu0
        %v1651 = vadd.f32 0.0, %v1650
        %v1652 = vpop.f32.mrb[0].mxu0
        %v1653 = vpop.f32.mrb[0].mxu0
        %v1654 = vpop.f32.mrb[0].mxu0
        %1655 = vdwg.mxu0
        %v1656 = vadd.f32 %v1605, %v1651
        %s1657 = scalar_lea.vmem %s356, 50
        %v1658 = vld [vmem:[%s1657] sm:$0x3]
        %1659 = vrot.lane.b32.xlu0 %v1352, 107
        %v1660 = vpop.permute.xlu0 %1659
        %v1662 = vsel %vm378, %v1658, 0
        %v1665 = vsel %vm382, %v1660, 0
        %1667 = vmatprep.subr.bf16.mxu0 0
        %1668 = vmatpush1.bf16.msra.mxu0 %v1665
        %1669 = vmatprep.subr.bf16.mxu0 0
        %1670 = vmatpush1.bf16.msra.mxu0 0
        %1671 = vmatprep.subr.bf16.mxu0 0
        %1672 = vmatpush1.bf16.msra.mxu0 0
        %1673 = vmatprep.subr.bf16.mxu0 0
        %1674 = vmatpush1.bf16.msra.mxu0 0
        %1675 = vmatprep.subr.bf16.mxu0 0
        %1676 = vmatpush1.bf16.msra.mxu0 0
        %1677 = vmatprep.subr.bf16.mxu0 0
        %1678 = vmatpush1.bf16.msra.mxu0 0
        %1679 = vmatprep.subr.bf16.mxu0 0
        %1680 = vmatpush1.bf16.msra.mxu0 0
        %1681 = vmatprep.subr.bf16.mxu0 0
        %1682 = vmatpush1.bf16.msra.mxu0 0
        %1683 = vmatprep.subr.bf16.mxu0 0
        %1684 = vmatpush1.bf16.msra.mxu0 0
        %1685 = vmatprep.subr.bf16.mxu0 0
        %1686 = vmatpush1.bf16.msra.mxu0 0
        %1687 = vmatprep.subr.bf16.mxu0 0
        %1688 = vmatpush1.bf16.msra.mxu0 0
        %1689 = vmatprep.subr.bf16.mxu0 0
        %1690 = vmatpush1.bf16.msra.mxu0 0
        %1691 = vmatprep.subr.bf16.mxu0 0
        %1692 = vmatpush1.bf16.msra.mxu0 0
        %1693 = vmatprep.subr.bf16.mxu0 0
        %1694 = vmatpush1.bf16.msra.mxu0 0
        %1695 = vmatprep.subr.bf16.mxu0 0
        %1696 = vmatpush1.bf16.msra.mxu0 0
        %1697 = vmatprep.subr.bf16.mxu0 0
        %1698 = vmatpush1.bf16.msra.mxu0 0
        %1699 = vmatprep.mubr.bf16.mxu0 0
        %1700 = vmatmul.mubr.bf16.gmra.mrb[0].mxu0 %v1662
        %v1701 = vpop.f32.mrb[0].mxu0
        %v1702 = vadd.f32 0.0, %v1701
        %v1703 = vpop.f32.mrb[0].mxu0
        %v1704 = vpop.f32.mrb[0].mxu0
        %v1705 = vpop.f32.mrb[0].mxu0
        %1706 = vdwg.mxu0
        %v1707 = vadd.f32 %v1656, %v1702
        %s1708 = scalar_lea.vmem %s356, 52
        %v1709 = vld [vmem:[%s1708] sm:$0x3]
        %1710 = vrot.lane.b32.xlu0 %v1352, 106
        %v1711 = vpop.permute.xlu0 %1710
        %v1713 = vsel %vm378, %v1709, 0
        %v1716 = vsel %vm382, %v1711, 0
        %1718 = vmatprep.subr.bf16.mxu0 0
        %1719 = vmatpush1.bf16.msra.mxu0 %v1716
        %1720 = vmatprep.subr.bf16.mxu0 0
        %1721 = vmatpush1.bf16.msra.mxu0 0
        %1722 = vmatprep.subr.bf16.mxu0 0
        %1723 = vmatpush1.bf16.msra.mxu0 0
        %1724 = vmatprep.subr.bf16.mxu0 0
        %1725 = vmatpush1.bf16.msra.mxu0 0
        %1726 = vmatprep.subr.bf16.mxu0 0
        %1727 = vmatpush1.bf16.msra.mxu0 0
        %1728 = vmatprep.subr.bf16.mxu0 0
        %1729 = vmatpush1.bf16.msra.mxu0 0
        %1730 = vmatprep.subr.bf16.mxu0 0
        %1731 = vmatpush1.bf16.msra.mxu0 0
        %1732 = vmatprep.subr.bf16.mxu0 0
        %1733 = vmatpush1.bf16.msra.mxu0 0
        %1734 = vmatprep.subr.bf16.mxu0 0
        %1735 = vmatpush1.bf16.msra.mxu0 0
        %1736 = vmatprep.subr.bf16.mxu0 0
        %1737 = vmatpush1.bf16.msra.mxu0 0
        %1738 = vmatprep.subr.bf16.mxu0 0
        %1739 = vmatpush1.bf16.msra.mxu0 0
        %1740 = vmatprep.subr.bf16.mxu0 0
        %1741 = vmatpush1.bf16.msra.mxu0 0
        %1742 = vmatprep.subr.bf16.mxu0 0
        %1743 = vmatpush1.bf16.msra.mxu0 0
        %1744 = vmatprep.subr.bf16.mxu0 0
        %1745 = vmatpush1.bf16.msra.mxu0 0
        %1746 = vmatprep.subr.bf16.mxu0 0
        %1747 = vmatpush1.bf16.msra.mxu0 0
        %1748 = vmatprep.subr.bf16.mxu0 0
        %1749 = vmatpush1.bf16.msra.mxu0 0
        %1750 = vmatprep.mubr.bf16.mxu0 0
        %1751 = vmatmul.mubr.bf16.gmra.mrb[0].mxu0 %v1713
        %v1752 = vpop.f32.mrb[0].mxu0
        %v1753 = vadd.f32 0.0, %v1752
        %v1754 = vpop.f32.mrb[0].mxu0
        %v1755 = vpop.f32.mrb[0].mxu0
        %v1756 = vpop.f32.mrb[0].mxu0
        %1757 = vdwg.mxu0
        %v1758 = vadd.f32 %v1707, %v1753
        %v1759 = vld [vmem:[%s360] sm:$0xf]
        %1761 = vset.pattern.permute.xlu0 0
        %1762 = vperm.xlu0 %1761, %v1759
        %v1763 = vpop.permute.xlu0 %1762
        %v1765 = vadd.f32 %v1758, %v1763
        %vm1766 = vcmask 633856
        %1767 = vst.msk [vmem:[%s323] sm:$0xf] %vm1766, %v1765
        %s1768 = sand.u32 %s181, 1
        %s1769 = scalar_lea.sflag [#allocation3], %s1768
        %s1770 = sand.u32 %s181, 1
        %s1771 = smul.addr %s1770, 4
        %s1772 = scalar_lea.vmem [#allocation2], %s1771
        // Predicated region
        $region41: #{tpu_custom_call.1} parent=39 // pred_check
          %p1773 = pneg %p191
        $region42: #{tpu_custom_call.1} parent=39 // pred_check_branch
          %1775 = sbr.rel (%p1773) target = $region44
        $region43: #{tpu_custom_call.1} parent=39 // pred_region
          %s1777 = ssub.s32 64, 64
          %1778 = vsyncadd %s1769, %s1777
          %s1779 = smul.addr %s23, 8
          %s1780 = sadd.s32 %s24, %s1779
          %s1781 = smul.addr %s1780, 64
          %s1782 = scalar_lea.hbm %s5, %s1781
          %s1784 = sshll.u32 %s1772, 4
          %s1785 = int_to_ptr.vmem [resolvable:$true] %s1784
          %1787 = dma.vmem_to_hbm [thread:$0]  %s1785, 64, %s1782, %s1769
        $region44: #{tpu_custom_call.1} parent=39 // pred_fallthru
          _
      $region40: #{tpu_custom_call.1} parent=5 // pred_fallthru
        _
      %p1788 = scmp.le.s32.totalorder 2, %s14
      // Predicated region
      $region45: #{tpu_custom_call.1} parent=5 // pred_check
        %p1789 = pneg %p1788
      $region46: #{tpu_custom_call.1} parent=5 // pred_check_branch
        %1791 = sbr.rel (%p1789) target = $region48
      $region47: #{tpu_custom_call.1} parent=5 // pred_region
        %s1792 = ssub.s32 %s14, 2
        // Predicated region
        $region49: #{tpu_custom_call.1} parent=47 // pred_check
          %p1793 = pneg %p197
        $region50: #{tpu_custom_call.1} parent=47 // pred_check_branch
          %1795 = sbr.rel (%p1793) target = $region52
        $region51: #{tpu_custom_call.1} parent=47 // pred_region
          %s1796 = sand.u32 %s182, 1
          %s1797 = scalar_lea.sflag [#allocation3], %s1796
          %s1798 = sand.u32 %s182, 1
          %s1799 = smul.addr %s1798, 4
          %s1800 = scalar_lea.vmem [#allocation2], %s1799
          %1801 = dma.done %s1797, 64
        $region52: #{tpu_custom_call.1} parent=47 // pred_fallthru
          _
      $region48: #{tpu_custom_call.1} parent=5 // pred_fallthru
        _
    $region6: #{tpu_custom_call.1} parent=1 // loop_footer
      %s18 = sadd.s32 1, %s14
    $region7: #{tpu_custom_call.1} parent=1 // loop_footer_branch
      %13 = sbr.rel target = $region3
    $region8: #{tpu_custom_call.1} parent=1 // loop_exit
      _
    %1802 = vsyncpa [#allocation3], 1
    %s1803 = scalar_lea.sflag [#allocation3], 1
    %1804 = vsyncpa %s1803, 1

</llo_original>
